<compile_context>
chip_gen: v7x
topology: tpu7x:2x2x1
jax: 0.10.0
libtpu: 0.0.40
codegen_flags: <defaults>
</compile_context>

<pallas_src>
import functools

import jax
import jax.numpy as jnp
from jax.experimental import pallas as pl
from jax.experimental.pallas import tpu as pltpu


# ----------------------------- Pallas kernel ---------------------------------

def encoder_layer_kernel(x_ref, win_ref, bin_ref, wout_ref, bout_ref,
                         w1_ref, b1_ref, w2_ref, b2_ref,
                         g1_ref, beta1_ref, g2_ref, beta2_ref,
                         o_ref, *, num_heads):
    _, S, D = x_ref.shape
    hd = D // num_heads
    scaling = 1.0 / float(hd) ** 0.5
    eps = 1e-5
    bf16 = jnp.bfloat16

    # Current batch tile, cast once to bf16 for the MXU. No f32 copy of x is kept:
    # this layer's residuals only use the attention / FFN outputs, never x itself.
    x = x_ref[0].astype(bf16)                                    # (S, D)

    # ---- QKV projection (bf16 x bf16 -> f32 accumulate) -------------------
    qkv = jnp.dot(x, win_ref[...], preferred_element_type=jnp.float32)
    qkv = qkv + bin_ref[...]                                     # (S, 3D) f32
    q = (qkv[:, :D] * scaling).astype(bf16)
    k = qkv[:, D:2 * D].astype(bf16)
    v = qkv[:, 2 * D:].astype(bf16)

    # ---- multi-head attention with the output projection folded in --------
    # attn = sum_h softmax(q_h k_h^T) v_h @ W_out[h*hd:(h+1)*hd, :] + b_out
    # (plain 2-D dots per head: multi-batch-dim dot_general lowering is not
    #  guaranteed in Mosaic; accumulating into the out-proj avoids the concat copy)
    attn = None
    for h in range(num_heads):                                   # static unroll
        sl = slice(h * hd, (h + 1) * hd)
        qh, kh, vh = q[:, sl], k[:, sl], v[:, sl]
        s = jnp.einsum('qd,kd->qk', qh, kh,
                       preferred_element_type=jnp.float32)       # (S, S) f32
        s = s - jnp.max(s, axis=-1, keepdims=True)
        p = jnp.exp(s)                                           # EUP, f32
        p = p * pl.reciprocal(jnp.sum(p, axis=-1, keepdims=True), approx=True)
        ctx = jnp.dot(p.astype(bf16), vh,
                      preferred_element_type=jnp.float32)        # (S, hd)
        term = jnp.dot(ctx.astype(bf16), wout_ref[sl, :],
                       preferred_element_type=jnp.float32)       # (S, D)
        attn = term if attn is None else attn + term
    attn = attn + bout_ref[...]

    # ---- residual (src = attn + dropout1(attn) == 2*attn) + LayerNorm1 ----
    h1 = attn + attn
    mu = jnp.mean(h1, axis=-1, keepdims=True)
    var = jnp.mean((h1 - mu) ** 2, axis=-1, keepdims=True)
    h1 = (h1 - mu) * jax.lax.rsqrt(var + eps) * g1_ref[...] + beta1_ref[...]

    # ---- feed-forward: linear2(relu(linear1(x))) ---------------------------
    ff = jnp.dot(h1.astype(bf16), w1_ref[...],
                 preferred_element_type=jnp.float32) + b1_ref[...]
    ff = jnp.maximum(ff, 0.0)
    ff = jnp.dot(ff.astype(bf16), w2_ref[...],
                 preferred_element_type=jnp.float32) + b2_ref[...]

    # ---- residual (out = ff + dropout2(ff) == 2*ff) + LayerNorm2 -----------
    h2 = ff + ff
    mu2 = jnp.mean(h2, axis=-1, keepdims=True)
    var2 = jnp.mean((h2 - mu2) ** 2, axis=-1, keepdims=True)
    out = (h2 - mu2) * jax.lax.rsqrt(var2 + eps) * g2_ref[...] + beta2_ref[...]

    o_ref[0] = out.astype(o_ref.dtype)


# ------------------------------- wrapper --------------------------------------

def transformer_encoder_layer(src, params, *, num_heads):
    """src: (S, B, D) float32 (PyTorch (tgt_len, bsz, embed_dim) layout)."""
    S, B, D = src.shape
    dff = params["w1"].shape[1]

    # (B, S, D): puts D on the lane axis and makes batch a clean, independent grid
    # axis (attention needs the whole sequence of a batch per step).
    # TODO(synk): the (S,B,D)<->(B,S,D) transposes are plain XLA ops outside the
    # kernel; removing them would need a strided per-batch BlockSpec on the raw layout.
    x = jnp.transpose(src, (1, 0, 2))

    bf16 = jnp.bfloat16
    args = (
        x,
        params["w_in"].astype(bf16), params["b_in"],
        params["w_out"].astype(bf16), params["b_out"],
        params["w1"].astype(bf16), params["b1"],
        params["w2"].astype(bf16), params["b2"],
        params["g1"], params["beta1"], params["g2"], params["beta2"],
    )

    # Activations: one batch per grid step (software-pipelined DMA).
    # Weights / biases / LN params: constant block index -> DMA'd once, resident.
    act_spec = pl.BlockSpec((1, S, D), lambda b: (b, 0, 0))
    in_specs = [act_spec] + [
        pl.BlockSpec(a.shape, lambda b: (0, 0)) for a in args[1:]
    ]

    flops = 2 * B * S * (4 * D * D + 2 * D * dff) + 4 * B * S * S * D
    bytes_accessed = (
        x.size * x.dtype.itemsize
        + sum(a.size * a.dtype.itemsize for a in args[1:])
        + B * S * D * 4
    )
    cost = pl.CostEstimate(flops=flops,
                           transcendentals=B * num_heads * S * S,
                           bytes_accessed=bytes_accessed)

    out = pl.pallas_call(
        functools.partial(encoder_layer_kernel, num_heads=num_heads),
        out_shape=jax.ShapeDtypeStruct((B, S, D), src.dtype),
        grid_spec=pltpu.PrefetchScalarGridSpec(
            num_scalar_prefetch=0,
            grid=(B,),
            in_specs=in_specs,
            out_specs=act_spec,
        ),
        compiler_params=pltpu.CompilerParams(
            dimension_semantics=("parallel",),
            vmem_limit_bytes=48 * 1024 * 1024,
        ),
        cost_estimate=cost,
    )(*args)
    return jnp.transpose(out, (1, 0, 2))  # back to (S, B, D)


# --------------------------- pure-JAX reference --------------------------------

def reference_forward(src, params, *, num_heads):
    S, B, D = src.shape
    hd = D // num_heads
    scaling = 1.0 / float(hd) ** 0.5
    eps = 1e-5

    def ln(x, g, b):
        mu = jnp.mean(x, axis=-1, keepdims=True)
        var = jnp.mean((x - mu) ** 2, axis=-1, keepdims=True)
        return (x - mu) / jnp.sqrt(var + eps) * g + b

    P = src @ params["w_in"] + params["b_in"]          # (S, B, 3D)
    q, k, v = P[..., :D], P[..., D:2 * D], P[..., 2 * D:]
    q = q * scaling
    q = q.reshape(S, B * num_heads, hd).transpose(1, 0, 2)
    k = k.reshape(S, B * num_heads, hd).transpose(1, 0, 2)
    v = v.reshape(S, B * num_heads, hd).transpose(1, 0, 2)
    w = jax.nn.softmax(jnp.einsum('bqd,bkd->bqk', q, k), axis=-1)
    H = jnp.einsum('bqk,bkd->bqd', w, v)
    H = H.transpose(1, 0, 2).reshape(S, B, D)
    attn = H @ params["w_out"] + params["b_out"]

    x = ln(attn + attn, params["g1"][0], params["beta1"][0])
    ff = jax.nn.relu(x @ params["w1"] + params["b1"]) @ params["w2"] + params["b2"]
    return ln(ff + ff, params["g2"][0], params["beta2"][0])


# ------------------------------- params ----------------------------------------

def make_params(key, d_model, dim_feedforward):
    ks = jax.random.split(key, 4)
    scale = 0.1
    f32 = jnp.float32
    return {
        # linear weights stored as (in, out) so the kernel does x @ W + b
        "w_in":  scale * jax.random.normal(ks[0], (d_model, 3 * d_model), f32),
        "b_in":  jnp.zeros((1, 3 * d_model), f32),
        "w_out": scale * jax.random.normal(ks[1], (d_model, d_model), f32),
        "b_out": jnp.zeros((1, d_model), f32),
        "w1":    scale * jax.random.normal(ks[2], (d_model, dim_feedforward), f32),
        "b1":    0.01 * jnp.ones((1, dim_feedforward), f32),
        "w2":    scale * jax.random.normal(ks[3], (dim_feedforward, d_model), f32),
        "b2":    0.01 * jnp.ones((1, d_model), f32),
        # LayerNorm affine params (PyTorch default init: weight=1, bias=0)
        "g1":    jnp.ones((1, d_model), f32),
        "beta1": jnp.zeros((1, d_model), f32),
        "g2":    jnp.ones((1, d_model), f32),
        "beta2": jnp.zeros((1, d_model), f32),
    }


# --------------------------------- main -----------------------------------------

if __name__ == "__main__":
    S, B, D = 8, 2, 32          # seq_len, batch, d_model
    NHEAD = 4
    DIM_FF = 64

    key = jax.random.PRNGKey(0)
    k_src, k_par = jax.random.split(key)
    src = jax.random.normal(k_src, (S, B, D), jnp.float32)
    params = make_params(k_par, D, DIM_FF)

    out = transformer_encoder_layer(src, params, num_heads=NHEAD)
    out = jax.block_until_ready(out)

    ref = reference_forward(src, params, num_heads=NHEAD)
    assert out.shape == (S, B, D)
    # bf16 MXU operands (f32 accumulation) + approx reciprocal -> looser tolerance
    assert jnp.allclose(out, ref, atol=5e-2, rtol=5e-2), \
        f"max abs diff {jnp.max(jnp.abs(out - ref))}"

    print("KERNEL_OK")
</pallas_src>

<mosaic_0001>
module attributes {stable_mosaic.version = 11 : i64} {
  func.func @encoder_layer_kernel(%arg0: i32, %arg1: memref<1x8x32xf32, #tpu.memory_space<vmem>>, %arg2: memref<32x96xbf16, #tpu.memory_space<vmem>>, %arg3: memref<1x96xf32, #tpu.memory_space<vmem>>, %arg4: memref<32x32xbf16, #tpu.memory_space<vmem>>, %arg5: memref<1x32xf32, #tpu.memory_space<vmem>>, %arg6: memref<32x64xbf16, #tpu.memory_space<vmem>>, %arg7: memref<1x64xf32, #tpu.memory_space<vmem>>, %arg8: memref<64x32xbf16, #tpu.memory_space<vmem>>, %arg9: memref<1x32xf32, #tpu.memory_space<vmem>>, %arg10: memref<1x32xf32, #tpu.memory_space<vmem>>, %arg11: memref<1x32xf32, #tpu.memory_space<vmem>>, %arg12: memref<1x32xf32, #tpu.memory_space<vmem>>, %arg13: memref<1x32xf32, #tpu.memory_space<vmem>>, %arg14: memref<1x8x32xf32, #tpu.memory_space<vmem>>) attributes {dimension_semantics = [#tpu.dimension_semantics<parallel>], iteration_bounds = array<i64: 2>, scalar_prefetch = 0 : i64, scratch_operands = 0 : i64, tpu.core_type = #tpu.core_type<tc>, window_params = [{transform_indices = @transform_0, window_bounds = array<i64: 1, 8, 32>}, {pipeline_mode = #tpu.pipeline_mode<synchronous>, transform_indices = @transform_1, window_bounds = array<i64: 32, 96>}, {pipeline_mode = #tpu.pipeline_mode<synchronous>, transform_indices = @transform_2, window_bounds = array<i64: 1, 96>}, {pipeline_mode = #tpu.pipeline_mode<synchronous>, transform_indices = @transform_3, window_bounds = array<i64: 32, 32>}, {pipeline_mode = #tpu.pipeline_mode<synchronous>, transform_indices = @transform_4, window_bounds = array<i64: 1, 32>}, {pipeline_mode = #tpu.pipeline_mode<synchronous>, transform_indices = @transform_5, window_bounds = array<i64: 32, 64>}, {pipeline_mode = #tpu.pipeline_mode<synchronous>, transform_indices = @transform_6, window_bounds = array<i64: 1, 64>}, {pipeline_mode = #tpu.pipeline_mode<synchronous>, transform_indices = @transform_7, window_bounds = array<i64: 64, 32>}, {pipeline_mode = #tpu.pipeline_mode<synchronous>, transform_indices = @transform_8, window_bounds = array<i64: 1, 32>}, {pipeline_mode = #tpu.pipeline_mode<synchronous>, transform_indices = @transform_9, window_bounds = array<i64: 1, 32>}, {pipeline_mode = #tpu.pipeline_mode<synchronous>, transform_indices = @transform_10, window_bounds = array<i64: 1, 32>}, {pipeline_mode = #tpu.pipeline_mode<synchronous>, transform_indices = @transform_11, window_bounds = array<i64: 1, 32>}, {pipeline_mode = #tpu.pipeline_mode<synchronous>, transform_indices = @transform_12, window_bounds = array<i64: 1, 32>}, {transform_indices = @transform_13, window_bounds = array<i64: 1, 8, 32>}]} {
    %c0 = arith.constant 0 : index
    %c0_0 = arith.constant 0 : index
    %c0_1 = arith.constant 0 : index
    %0 = vector.load %arg1[%c0, %c0_0, %c0_1] : memref<1x8x32xf32, #tpu.memory_space<vmem>>, vector<1x8x32xf32>
    %1 = vector.shape_cast %0 : vector<1x8x32xf32> to vector<8x32xf32>
    %2 = arith.truncf %1 : vector<8x32xf32> to vector<8x32xbf16>
    %c0_2 = arith.constant 0 : index
    %c0_3 = arith.constant 0 : index
    %3 = vector.load %arg2[%c0_2, %c0_3] : memref<32x96xbf16, #tpu.memory_space<vmem>>, vector<32x96xbf16>
    %cst = arith.constant dense<0.000000e+00> : vector<8x96xf32>
    %4 = tpu.matmul %2, %3, %cst {dimension_numbers = #tpu.dot_dimension_numbers<[1], [0], [0], [1], [0, 0, 1, 1], [], []>} : vector<8x32xbf16>, vector<32x96xbf16>, vector<8x96xf32> -> vector<8x96xf32>
    %c0_4 = arith.constant 0 : index
    %c0_5 = arith.constant 0 : index
    %5 = vector.load %arg3[%c0_4, %c0_5] : memref<1x96xf32, #tpu.memory_space<vmem>>, vector<1x96xf32>
    %6 = vector.broadcast %5 : vector<1x96xf32> to vector<8x96xf32>
    %7 = arith.addf %4, %6 : vector<8x96xf32>
    %8 = vector.extract_strided_slice %7 {offsets = [0, 0], sizes = [8, 32], strides = [1, 1]} : vector<8x96xf32> to vector<8x32xf32>
    %cst_6 = arith.constant 0.353553385 : f32
    %9 = vector.broadcast %cst_6 : f32 to vector<8x32xf32>
    %10 = arith.mulf %8, %9 : vector<8x32xf32>
    %11 = arith.truncf %10 : vector<8x32xf32> to vector<8x32xbf16>
    %12 = vector.extract_strided_slice %7 {offsets = [0, 32], sizes = [8, 32], strides = [1, 1]} : vector<8x96xf32> to vector<8x32xf32>
    %13 = arith.truncf %12 : vector<8x32xf32> to vector<8x32xbf16>
    %14 = vector.extract_strided_slice %7 {offsets = [0, 64], sizes = [8, 32], strides = [1, 1]} : vector<8x96xf32> to vector<8x32xf32>
    %15 = arith.truncf %14 : vector<8x32xf32> to vector<8x32xbf16>
    %16 = vector.extract_strided_slice %11 {offsets = [0, 0], sizes = [8, 8], strides = [1, 1]} : vector<8x32xbf16> to vector<8x8xbf16>
    %17 = vector.extract_strided_slice %13 {offsets = [0, 0], sizes = [8, 8], strides = [1, 1]} : vector<8x32xbf16> to vector<8x8xbf16>
    %18 = vector.extract_strided_slice %15 {offsets = [0, 0], sizes = [8, 8], strides = [1, 1]} : vector<8x32xbf16> to vector<8x8xbf16>
    "tpu.trace_start"() <{level = 10 : i32, message = "qd,kd->qk"}> : () -> ()
    %cst_7 = arith.constant dense<0.000000e+00> : vector<8x8xf32>
    %19 = tpu.matmul %16, %17, %cst_7 {dimension_numbers = #tpu.dot_dimension_numbers<[1], [1], [0], [0], [0, 0, 1, 0], [], []>} : vector<8x8xbf16>, vector<8x8xbf16>, vector<8x8xf32> -> vector<8x8xf32>
    "tpu.trace_stop"() : () -> ()
    %cst_8 = arith.constant dense<0xFF800000> : vector<8xf32>
    %20 = vector.multi_reduction <maximumf>, %19, %cst_8 [1] : vector<8x8xf32> to vector<8xf32>
    %21 = vector.shape_cast %20 : vector<8xf32> to vector<8x1xf32>
    %22 = vector.broadcast %21 : vector<8x1xf32> to vector<8x8xf32>
    %23 = arith.subf %19, %22 : vector<8x8xf32>
    %24 = math.exp %23 : vector<8x8xf32>
    %cst_9 = arith.constant dense<0.000000e+00> : vector<8xf32>
    %25 = vector.multi_reduction <add>, %24, %cst_9 [1] : vector<8x8xf32> to vector<8xf32>
    %26 = vector.shape_cast %25 : vector<8xf32> to vector<8x1xf32>
    %27 = tpu.reciprocal %26 {approx = true} : vector<8x1xf32> -> vector<8x1xf32>
    %28 = vector.broadcast %27 : vector<8x1xf32> to vector<8x8xf32>
    %29 = arith.mulf %24, %28 : vector<8x8xf32>
    %30 = arith.truncf %29 : vector<8x8xf32> to vector<8x8xbf16>
    %cst_10 = arith.constant dense<0.000000e+00> : vector<8x8xf32>
    %31 = tpu.matmul %30, %18, %cst_10 {dimension_numbers = #tpu.dot_dimension_numbers<[1], [0], [0], [1], [0, 0, 1, 1], [], []>} : vector<8x8xbf16>, vector<8x8xbf16>, vector<8x8xf32> -> vector<8x8xf32>
    %32 = arith.truncf %31 : vector<8x8xf32> to vector<8x8xbf16>
    %c0_11 = arith.constant 0 : index
    %c0_12 = arith.constant 0 : index
    %33 = vector.load %arg4[%c0_11, %c0_12] : memref<32x32xbf16, #tpu.memory_space<vmem>>, vector<8x32xbf16>
    %cst_13 = arith.constant dense<0.000000e+00> : vector<8x32xf32>
    %34 = tpu.matmul %32, %33, %cst_13 {dimension_numbers = #tpu.dot_dimension_numbers<[1], [0], [0], [1], [0, 0, 1, 1], [], []>} : vector<8x8xbf16>, vector<8x32xbf16>, vector<8x32xf32> -> vector<8x32xf32>
    %35 = vector.extract_strided_slice %11 {offsets = [0, 8], sizes = [8, 8], strides = [1, 1]} : vector<8x32xbf16> to vector<8x8xbf16>
    %36 = vector.extract_strided_slice %13 {offsets = [0, 8], sizes = [8, 8], strides = [1, 1]} : vector<8x32xbf16> to vector<8x8xbf16>
    %37 = vector.extract_strided_slice %15 {offsets = [0, 8], sizes = [8, 8], strides = [1, 1]} : vector<8x32xbf16> to vector<8x8xbf16>
    "tpu.trace_start"() <{level = 10 : i32, message = "qd,kd->qk"}> : () -> ()
    %cst_14 = arith.constant dense<0.000000e+00> : vector<8x8xf32>
    %38 = tpu.matmul %35, %36, %cst_14 {dimension_numbers = #tpu.dot_dimension_numbers<[1], [1], [0], [0], [0, 0, 1, 0], [], []>} : vector<8x8xbf16>, vector<8x8xbf16>, vector<8x8xf32> -> vector<8x8xf32>
    "tpu.trace_stop"() : () -> ()
    %cst_15 = arith.constant dense<0xFF800000> : vector<8xf32>
    %39 = vector.multi_reduction <maximumf>, %38, %cst_15 [1] : vector<8x8xf32> to vector<8xf32>
    %40 = vector.shape_cast %39 : vector<8xf32> to vector<8x1xf32>
    %41 = vector.broadcast %40 : vector<8x1xf32> to vector<8x8xf32>
    %42 = arith.subf %38, %41 : vector<8x8xf32>
    %43 = math.exp %42 : vector<8x8xf32>
    %cst_16 = arith.constant dense<0.000000e+00> : vector<8xf32>
    %44 = vector.multi_reduction <add>, %43, %cst_16 [1] : vector<8x8xf32> to vector<8xf32>
    %45 = vector.shape_cast %44 : vector<8xf32> to vector<8x1xf32>
    %46 = tpu.reciprocal %45 {approx = true} : vector<8x1xf32> -> vector<8x1xf32>
    %47 = vector.broadcast %46 : vector<8x1xf32> to vector<8x8xf32>
    %48 = arith.mulf %43, %47 : vector<8x8xf32>
    %49 = arith.truncf %48 : vector<8x8xf32> to vector<8x8xbf16>
    %cst_17 = arith.constant dense<0.000000e+00> : vector<8x8xf32>
    %50 = tpu.matmul %49, %37, %cst_17 {dimension_numbers = #tpu.dot_dimension_numbers<[1], [0], [0], [1], [0, 0, 1, 1], [], []>} : vector<8x8xbf16>, vector<8x8xbf16>, vector<8x8xf32> -> vector<8x8xf32>
    %51 = arith.truncf %50 : vector<8x8xf32> to vector<8x8xbf16>
    %c8 = arith.constant 8 : index
    %c0_18 = arith.constant 0 : index
    %52 = vector.load %arg4[%c8, %c0_18] : memref<32x32xbf16, #tpu.memory_space<vmem>>, vector<8x32xbf16>
    %cst_19 = arith.constant dense<0.000000e+00> : vector<8x32xf32>
    %53 = tpu.matmul %51, %52, %cst_19 {dimension_numbers = #tpu.dot_dimension_numbers<[1], [0], [0], [1], [0, 0, 1, 1], [], []>} : vector<8x8xbf16>, vector<8x32xbf16>, vector<8x32xf32> -> vector<8x32xf32>
    %54 = arith.addf %34, %53 : vector<8x32xf32>
    %55 = vector.extract_strided_slice %11 {offsets = [0, 16], sizes = [8, 8], strides = [1, 1]} : vector<8x32xbf16> to vector<8x8xbf16>
    %56 = vector.extract_strided_slice %13 {offsets = [0, 16], sizes = [8, 8], strides = [1, 1]} : vector<8x32xbf16> to vector<8x8xbf16>
    %57 = vector.extract_strided_slice %15 {offsets = [0, 16], sizes = [8, 8], strides = [1, 1]} : vector<8x32xbf16> to vector<8x8xbf16>
    "tpu.trace_start"() <{level = 10 : i32, message = "qd,kd->qk"}> : () -> ()
    %cst_20 = arith.constant dense<0.000000e+00> : vector<8x8xf32>
    %58 = tpu.matmul %55, %56, %cst_20 {dimension_numbers = #tpu.dot_dimension_numbers<[1], [1], [0], [0], [0, 0, 1, 0], [], []>} : vector<8x8xbf16>, vector<8x8xbf16>, vector<8x8xf32> -> vector<8x8xf32>
    "tpu.trace_stop"() : () -> ()
    %cst_21 = arith.constant dense<0xFF800000> : vector<8xf32>
    %59 = vector.multi_reduction <maximumf>, %58, %cst_21 [1] : vector<8x8xf32> to vector<8xf32>
    %60 = vector.shape_cast %59 : vector<8xf32> to vector<8x1xf32>
    %61 = vector.broadcast %60 : vector<8x1xf32> to vector<8x8xf32>
    %62 = arith.subf %58, %61 : vector<8x8xf32>
    %63 = math.exp %62 : vector<8x8xf32>
    %cst_22 = arith.constant dense<0.000000e+00> : vector<8xf32>
    %64 = vector.multi_reduction <add>, %63, %cst_22 [1] : vector<8x8xf32> to vector<8xf32>
    %65 = vector.shape_cast %64 : vector<8xf32> to vector<8x1xf32>
    %66 = tpu.reciprocal %65 {approx = true} : vector<8x1xf32> -> vector<8x1xf32>
    %67 = vector.broadcast %66 : vector<8x1xf32> to vector<8x8xf32>
    %68 = arith.mulf %63, %67 : vector<8x8xf32>
    %69 = arith.truncf %68 : vector<8x8xf32> to vector<8x8xbf16>
    %cst_23 = arith.constant dense<0.000000e+00> : vector<8x8xf32>
    %70 = tpu.matmul %69, %57, %cst_23 {dimension_numbers = #tpu.dot_dimension_numbers<[1], [0], [0], [1], [0, 0, 1, 1], [], []>} : vector<8x8xbf16>, vector<8x8xbf16>, vector<8x8xf32> -> vector<8x8xf32>
    %71 = arith.truncf %70 : vector<8x8xf32> to vector<8x8xbf16>
    %c16 = arith.constant 16 : index
    %c0_24 = arith.constant 0 : index
    %72 = vector.load %arg4[%c16, %c0_24] : memref<32x32xbf16, #tpu.memory_space<vmem>>, vector<8x32xbf16>
    %cst_25 = arith.constant dense<0.000000e+00> : vector<8x32xf32>
    %73 = tpu.matmul %71, %72, %cst_25 {dimension_numbers = #tpu.dot_dimension_numbers<[1], [0], [0], [1], [0, 0, 1, 1], [], []>} : vector<8x8xbf16>, vector<8x32xbf16>, vector<8x32xf32> -> vector<8x32xf32>
    %74 = arith.addf %54, %73 : vector<8x32xf32>
    %75 = vector.extract_strided_slice %11 {offsets = [0, 24], sizes = [8, 8], strides = [1, 1]} : vector<8x32xbf16> to vector<8x8xbf16>
    %76 = vector.extract_strided_slice %13 {offsets = [0, 24], sizes = [8, 8], strides = [1, 1]} : vector<8x32xbf16> to vector<8x8xbf16>
    %77 = vector.extract_strided_slice %15 {offsets = [0, 24], sizes = [8, 8], strides = [1, 1]} : vector<8x32xbf16> to vector<8x8xbf16>
    "tpu.trace_start"() <{level = 10 : i32, message = "qd,kd->qk"}> : () -> ()
    %cst_26 = arith.constant dense<0.000000e+00> : vector<8x8xf32>
    %78 = tpu.matmul %75, %76, %cst_26 {dimension_numbers = #tpu.dot_dimension_numbers<[1], [1], [0], [0], [0, 0, 1, 0], [], []>} : vector<8x8xbf16>, vector<8x8xbf16>, vector<8x8xf32> -> vector<8x8xf32>
    "tpu.trace_stop"() : () -> ()
    %cst_27 = arith.constant dense<0xFF800000> : vector<8xf32>
    %79 = vector.multi_reduction <maximumf>, %78, %cst_27 [1] : vector<8x8xf32> to vector<8xf32>
    %80 = vector.shape_cast %79 : vector<8xf32> to vector<8x1xf32>
    %81 = vector.broadcast %80 : vector<8x1xf32> to vector<8x8xf32>
    %82 = arith.subf %78, %81 : vector<8x8xf32>
    %83 = math.exp %82 : vector<8x8xf32>
    %cst_28 = arith.constant dense<0.000000e+00> : vector<8xf32>
    %84 = vector.multi_reduction <add>, %83, %cst_28 [1] : vector<8x8xf32> to vector<8xf32>
    %85 = vector.shape_cast %84 : vector<8xf32> to vector<8x1xf32>
    %86 = tpu.reciprocal %85 {approx = true} : vector<8x1xf32> -> vector<8x1xf32>
    %87 = vector.broadcast %86 : vector<8x1xf32> to vector<8x8xf32>
    %88 = arith.mulf %83, %87 : vector<8x8xf32>
    %89 = arith.truncf %88 : vector<8x8xf32> to vector<8x8xbf16>
    %cst_29 = arith.constant dense<0.000000e+00> : vector<8x8xf32>
    %90 = tpu.matmul %89, %77, %cst_29 {dimension_numbers = #tpu.dot_dimension_numbers<[1], [0], [0], [1], [0, 0, 1, 1], [], []>} : vector<8x8xbf16>, vector<8x8xbf16>, vector<8x8xf32> -> vector<8x8xf32>
    %91 = arith.truncf %90 : vector<8x8xf32> to vector<8x8xbf16>
    %c24 = arith.constant 24 : index
    %c0_30 = arith.constant 0 : index
    %92 = vector.load %arg4[%c24, %c0_30] : memref<32x32xbf16, #tpu.memory_space<vmem>>, vector<8x32xbf16>
    %cst_31 = arith.constant dense<0.000000e+00> : vector<8x32xf32>
    %93 = tpu.matmul %91, %92, %cst_31 {dimension_numbers = #tpu.dot_dimension_numbers<[1], [0], [0], [1], [0, 0, 1, 1], [], []>} : vector<8x8xbf16>, vector<8x32xbf16>, vector<8x32xf32> -> vector<8x32xf32>
    %94 = arith.addf %74, %93 : vector<8x32xf32>
    %c0_32 = arith.constant 0 : index
    %c0_33 = arith.constant 0 : index
    %95 = vector.load %arg5[%c0_32, %c0_33] : memref<1x32xf32, #tpu.memory_space<vmem>>, vector<1x32xf32>
    %96 = vector.broadcast %95 : vector<1x32xf32> to vector<8x32xf32>
    %97 = arith.addf %94, %96 : vector<8x32xf32>
    %98 = arith.addf %97, %97 : vector<8x32xf32>
    %cst_34 = arith.constant dense<0.000000e+00> : vector<8xf32>
    %99 = vector.multi_reduction <add>, %98, %cst_34 [1] : vector<8x32xf32> to vector<8xf32>
    %100 = vector.shape_cast %99 : vector<8xf32> to vector<8x1xf32>
    %cst_35 = arith.constant 3.200000e+01 : f32
    %101 = vector.broadcast %cst_35 : f32 to vector<8x1xf32>
    %102 = arith.divf %100, %101 : vector<8x1xf32>
    %103 = vector.broadcast %102 : vector<8x1xf32> to vector<8x32xf32>
    %104 = arith.subf %98, %103 : vector<8x32xf32>
    %105 = arith.mulf %104, %104 : vector<8x32xf32>
    %cst_36 = arith.constant dense<0.000000e+00> : vector<8xf32>
    %106 = vector.multi_reduction <add>, %105, %cst_36 [1] : vector<8x32xf32> to vector<8xf32>
    %107 = vector.shape_cast %106 : vector<8xf32> to vector<8x1xf32>
    %cst_37 = arith.constant 3.200000e+01 : f32
    %108 = vector.broadcast %cst_37 : f32 to vector<8x1xf32>
    %109 = arith.divf %107, %108 : vector<8x1xf32>
    %110 = vector.broadcast %102 : vector<8x1xf32> to vector<8x32xf32>
    %111 = arith.subf %98, %110 : vector<8x32xf32>
    %cst_38 = arith.constant 9.99999974E-6 : f32
    %112 = vector.broadcast %cst_38 : f32 to vector<8x1xf32>
    %113 = arith.addf %109, %112 : vector<8x1xf32>
    %114 = math.rsqrt %113 : vector<8x1xf32>
    %115 = vector.broadcast %114 : vector<8x1xf32> to vector<8x32xf32>
    %116 = arith.mulf %111, %115 : vector<8x32xf32>
    %c0_39 = arith.constant 0 : index
    %c0_40 = arith.constant 0 : index
    %117 = vector.load %arg10[%c0_39, %c0_40] : memref<1x32xf32, #tpu.memory_space<vmem>>, vector<1x32xf32>
    %118 = vector.broadcast %117 : vector<1x32xf32> to vector<8x32xf32>
    %119 = arith.mulf %116, %118 : vector<8x32xf32>
    %c0_41 = arith.constant 0 : index
    %c0_42 = arith.constant 0 : index
    %120 = vector.load %arg11[%c0_41, %c0_42] : memref<1x32xf32, #tpu.memory_space<vmem>>, vector<1x32xf32>
    %121 = vector.broadcast %120 : vector<1x32xf32> to vector<8x32xf32>
    %122 = arith.addf %119, %121 : vector<8x32xf32>
    %123 = arith.truncf %122 : vector<8x32xf32> to vector<8x32xbf16>
    %c0_43 = arith.constant 0 : index
    %c0_44 = arith.constant 0 : index
    %124 = vector.load %arg6[%c0_43, %c0_44] : memref<32x64xbf16, #tpu.memory_space<vmem>>, vector<32x64xbf16>
    %cst_45 = arith.constant dense<0.000000e+00> : vector<8x64xf32>
    %125 = tpu.matmul %123, %124, %cst_45 {dimension_numbers = #tpu.dot_dimension_numbers<[1], [0], [0], [1], [0, 0, 1, 1], [], []>} : vector<8x32xbf16>, vector<32x64xbf16>, vector<8x64xf32> -> vector<8x64xf32>
    %c0_46 = arith.constant 0 : index
    %c0_47 = arith.constant 0 : index
    %126 = vector.load %arg7[%c0_46, %c0_47] : memref<1x64xf32, #tpu.memory_space<vmem>>, vector<1x64xf32>
    %127 = vector.broadcast %126 : vector<1x64xf32> to vector<8x64xf32>
    %128 = arith.addf %125, %127 : vector<8x64xf32>
    %cst_48 = arith.constant 0.000000e+00 : f32
    %129 = vector.broadcast %cst_48 : f32 to vector<8x64xf32>
    %130 = arith.maximumf %128, %129 : vector<8x64xf32>
    %131 = arith.truncf %130 : vector<8x64xf32> to vector<8x64xbf16>
    %c0_49 = arith.constant 0 : index
    %c0_50 = arith.constant 0 : index
    %132 = vector.load %arg8[%c0_49, %c0_50] : memref<64x32xbf16, #tpu.memory_space<vmem>>, vector<64x32xbf16>
    %cst_51 = arith.constant dense<0.000000e+00> : vector<8x32xf32>
    %133 = tpu.matmul %131, %132, %cst_51 {dimension_numbers = #tpu.dot_dimension_numbers<[1], [0], [0], [1], [0, 0, 1, 1], [], []>} : vector<8x64xbf16>, vector<64x32xbf16>, vector<8x32xf32> -> vector<8x32xf32>
    %c0_52 = arith.constant 0 : index
    %c0_53 = arith.constant 0 : index
    %134 = vector.load %arg9[%c0_52, %c0_53] : memref<1x32xf32, #tpu.memory_space<vmem>>, vector<1x32xf32>
    %135 = vector.broadcast %134 : vector<1x32xf32> to vector<8x32xf32>
    %136 = arith.addf %133, %135 : vector<8x32xf32>
    %137 = arith.addf %136, %136 : vector<8x32xf32>
    %cst_54 = arith.constant dense<0.000000e+00> : vector<8xf32>
    %138 = vector.multi_reduction <add>, %137, %cst_54 [1] : vector<8x32xf32> to vector<8xf32>
    %139 = vector.shape_cast %138 : vector<8xf32> to vector<8x1xf32>
    %cst_55 = arith.constant 3.200000e+01 : f32
    %140 = vector.broadcast %cst_55 : f32 to vector<8x1xf32>
    %141 = arith.divf %139, %140 : vector<8x1xf32>
    %142 = vector.broadcast %141 : vector<8x1xf32> to vector<8x32xf32>
    %143 = arith.subf %137, %142 : vector<8x32xf32>
    %144 = arith.mulf %143, %143 : vector<8x32xf32>
    %cst_56 = arith.constant dense<0.000000e+00> : vector<8xf32>
    %145 = vector.multi_reduction <add>, %144, %cst_56 [1] : vector<8x32xf32> to vector<8xf32>
    %146 = vector.shape_cast %145 : vector<8xf32> to vector<8x1xf32>
    %cst_57 = arith.constant 3.200000e+01 : f32
    %147 = vector.broadcast %cst_57 : f32 to vector<8x1xf32>
    %148 = arith.divf %146, %147 : vector<8x1xf32>
    %149 = vector.broadcast %141 : vector<8x1xf32> to vector<8x32xf32>
    %150 = arith.subf %137, %149 : vector<8x32xf32>
    %cst_58 = arith.constant 9.99999974E-6 : f32
    %151 = vector.broadcast %cst_58 : f32 to vector<8x1xf32>
    %152 = arith.addf %148, %151 : vector<8x1xf32>
    %153 = math.rsqrt %152 : vector<8x1xf32>
    %154 = vector.broadcast %153 : vector<8x1xf32> to vector<8x32xf32>
    %155 = arith.mulf %150, %154 : vector<8x32xf32>
    %c0_59 = arith.constant 0 : index
    %c0_60 = arith.constant 0 : index
    %156 = vector.load %arg12[%c0_59, %c0_60] : memref<1x32xf32, #tpu.memory_space<vmem>>, vector<1x32xf32>
    %157 = vector.broadcast %156 : vector<1x32xf32> to vector<8x32xf32>
    %158 = arith.mulf %155, %157 : vector<8x32xf32>
    %c0_61 = arith.constant 0 : index
    %c0_62 = arith.constant 0 : index
    %159 = vector.load %arg13[%c0_61, %c0_62] : memref<1x32xf32, #tpu.memory_space<vmem>>, vector<1x32xf32>
    %160 = vector.broadcast %159 : vector<1x32xf32> to vector<8x32xf32>
    %161 = arith.addf %158, %160 : vector<8x32xf32>
    %c0_63 = arith.constant 0 : index
    %c0_64 = arith.constant 0 : index
    %c0_65 = arith.constant 0 : index
    %162 = vector.load %arg14[%c0_63, %c0_64, %c0_65] : memref<1x8x32xf32, #tpu.memory_space<vmem>>, vector<1x8x32xf32>
    %163 = vector.shape_cast %162 : vector<1x8x32xf32> to vector<8x32xf32>
    %164 = vector.shape_cast %161 : vector<8x32xf32> to vector<1x8x32xf32>
    tpu.vector_store %arg14[%c0_63, %c0_64, %c0_65], %164 {strides = array<i32>} : memref<1x8x32xf32, #tpu.memory_space<vmem>>, vector<1x8x32xf32>,
    return
  }
  func.func @transform_0(%arg0: i32) -> (i32, i32, i32) {
    %c0_i32 = arith.constant 0 : i32
    %c0_i32_0 = arith.constant 0 : i32
    %c0_i32_1 = arith.constant 0 : i32
    return %arg0, %c0_i32, %c0_i32_0 : i32, i32, i32
  }
  func.func @transform_1(%arg0: i32) -> (i32, i32) {
    %c0_i32 = arith.constant 0 : i32
    %c0_i32_0 = arith.constant 0 : i32
    %c0_i32_1 = arith.constant 0 : i32
    return %c0_i32, %c0_i32_0 : i32, i32
  }
  func.func @transform_2(%arg0: i32) -> (i32, i32) {
    %c0_i32 = arith.constant 0 : i32
    %c0_i32_0 = arith.constant 0 : i32
    %c0_i32_1 = arith.constant 0 : i32
    return %c0_i32, %c0_i32_0 : i32, i32
  }
  func.func @transform_3(%arg0: i32) -> (i32, i32) {
    %c0_i32 = arith.constant 0 : i32
    %c0_i32_0 = arith.constant 0 : i32
    %c0_i32_1 = arith.constant 0 : i32
    return %c0_i32, %c0_i32_0 : i32, i32
  }
  func.func @transform_4(%arg0: i32) -> (i32, i32) {
    %c0_i32 = arith.constant 0 : i32
    %c0_i32_0 = arith.constant 0 : i32
    %c0_i32_1 = arith.constant 0 : i32
    return %c0_i32, %c0_i32_0 : i32, i32
  }
  func.func @transform_5(%arg0: i32) -> (i32, i32) {
    %c0_i32 = arith.constant 0 : i32
    %c0_i32_0 = arith.constant 0 : i32
    %c0_i32_1 = arith.constant 0 : i32
    return %c0_i32, %c0_i32_0 : i32, i32
  }
  func.func @transform_6(%arg0: i32) -> (i32, i32) {
    %c0_i32 = arith.constant 0 : i32
    %c0_i32_0 = arith.constant 0 : i32
    %c0_i32_1 = arith.constant 0 : i32
    return %c0_i32, %c0_i32_0 : i32, i32
  }
  func.func @transform_7(%arg0: i32) -> (i32, i32) {
    %c0_i32 = arith.constant 0 : i32
    %c0_i32_0 = arith.constant 0 : i32
    %c0_i32_1 = arith.constant 0 : i32
    return %c0_i32, %c0_i32_0 : i32, i32
  }
  func.func @transform_8(%arg0: i32) -> (i32, i32) {
    %c0_i32 = arith.constant 0 : i32
    %c0_i32_0 = arith.constant 0 : i32
    %c0_i32_1 = arith.constant 0 : i32
    return %c0_i32, %c0_i32_0 : i32, i32
  }
  func.func @transform_9(%arg0: i32) -> (i32, i32) {
    %c0_i32 = arith.constant 0 : i32
    %c0_i32_0 = arith.constant 0 : i32
    %c0_i32_1 = arith.constant 0 : i32
    return %c0_i32, %c0_i32_0 : i32, i32
  }
  func.func @transform_10(%arg0: i32) -> (i32, i32) {
    %c0_i32 = arith.constant 0 : i32
    %c0_i32_0 = arith.constant 0 : i32
    %c0_i32_1 = arith.constant 0 : i32
    return %c0_i32, %c0_i32_0 : i32, i32
  }
  func.func @transform_11(%arg0: i32) -> (i32, i32) {
    %c0_i32 = arith.constant 0 : i32
    %c0_i32_0 = arith.constant 0 : i32
    %c0_i32_1 = arith.constant 0 : i32
    return %c0_i32, %c0_i32_0 : i32, i32
  }
  func.func @transform_12(%arg0: i32) -> (i32, i32) {
    %c0_i32 = arith.constant 0 : i32
    %c0_i32_0 = arith.constant 0 : i32
    %c0_i32_1 = arith.constant 0 : i32
    return %c0_i32, %c0_i32_0 : i32, i32
  }
  func.func @transform_13(%arg0: i32) -> (i32, i32, i32) {
    %c0_i32 = arith.constant 0 : i32
    %c0_i32_0 = arith.constant 0 : i32
    %c0_i32_1 = arith.constant 0 : i32
    return %arg0, %c0_i32, %c0_i32_0 : i32, i32, i32
  }
}

</mosaic_0001>

<llo_original>
// kernel: tpu_custom_call.1
$region0: #{tpu_custom_call.1}
  #allocation0 [shape = 'u32[]', space=smem, size = 0x4, offset = 0x4, fixed_abs, tag = 'smem constant byte address 0x4 - core index']
  #allocation1 [shape = 'u32[144,128]{1,0:T(1,128)}', space=vmem, size = 0x12000, scoped, tag = 'internal scratch']
  %s0 = inlined_call_operand.vmem [shape: f32[2,8,32], index: 0, kind: input, shape index: {}]
  %s1 = inlined_call_operand.vmem [shape: bf16[32,96], index: 1, kind: input, shape index: {}]
  %s2 = inlined_call_operand.vmem [shape: f32[1,96], index: 2, kind: input, shape index: {}]
  %s3 = inlined_call_operand.vmem [shape: bf16[32,32], index: 3, kind: input, shape index: {}]
  %s4 = inlined_call_operand.vmem [shape: f32[1,32], index: 4, kind: input, shape index: {}]
  %s5 = inlined_call_operand.hbm [shape: bf16[32,64], index: 5, kind: input, shape index: {}]
  %s6 = inlined_call_operand.vmem [shape: f32[1,64], index: 6, kind: input, shape index: {}]
  %s7 = inlined_call_operand.vmem [shape: bf16[64,32], index: 7, kind: input, shape index: {}]
  %s8 = inlined_call_operand.vmem [shape: f32[1,32], index: 8, kind: input, shape index: {}]
  %s9 = inlined_call_operand.vmem [shape: f32[1,32], index: 9, kind: input, shape index: {}]
  %s10 = inlined_call_operand.vmem [shape: f32[1,32], index: 10, kind: input, shape index: {}]
  %s11 = inlined_call_operand.vmem [shape: f32[1,32], index: 11, kind: input, shape index: {}]
  %s12 = inlined_call_operand.vmem [shape: f32[1,32], index: 12, kind: input, shape index: {}]
  %s13 = inlined_call_operand.hbm [shape: f32[2,8,32], index: 13, kind: output, shape index: {}]
  %s14 = sld [smem:[#allocation0]]
  $region89: #{tpu_custom_call.1} parent=0
    _
  %s16 = ssub.s32 1, %s14
  %s17 = scalar_select 0, %s16, %s14
  $region1: #{tpu_custom_call.1} parent=0
    #allocation2 [shape = 'u8[8192]{0}', space=vmem, size = 0x2000, scoped, tag = 'input window, operand 5, single buffered']
    #allocation3 [shape = 's32[2]{0}', space=sflag, size = 0x8, scoped, tag = 'scoped memory for tpu_custom_call.1']
    #allocation4 [shape = 's32[2]{0}', space=sflag, size = 0x8, scoped, tag = 'scoped memory for tpu_custom_call.1']
    #allocation5 [shape = 'u8[8192]{0}', space=vmem, size = 0x2000, scoped, tag = 'output window, operand 0']
    %18 = vsyncpa [#allocation3], 0
    %19 = vsyncpa [#allocation4], 0
    %s20 = scalar_lea.sflag [#allocation4], 1
    %21 = vsyncpa %s20, 0
    loop: start=0, step=1, limit=4
    $region2: #{tpu_custom_call.1} parent=1 // loop_pre_header
      _
    $region3: #{tpu_custom_call.1} parent=1 // loop_header
      %s23 = sphi 0, %s27
      %p24 = scmp.ge.s32.totalorder %s23, 4
      %s33 = sphi 0, %s35
      %s36 = sphi 0, %s33
      %s37 = sphi 0, %s36
      %s53 = sphi 0, %s37
      %s57 = sphi 0, %s57
      %s59 = sphi 0, %s57
      %s60 = sphi 0, %s59
      %s74 = sphi 0, %s60
      %s78 = sphi 0, %s78
      %s80 = sphi 0, %s78
      %s81 = sphi 0, %s80
      %s95 = sphi 0, %s81
      %s99 = sphi 0, %s99
      %s101 = sphi 0, %s99
      %s102 = sphi 0, %s101
      %s116 = sphi 0, %s102
      %s120 = sphi 0, %s120
      %s122 = sphi 0, %s120
      %s123 = sphi 0, %s122
      %s137 = sphi 0, %s123
      %s141 = sphi 0, %s141
      %s143 = sphi 0, %s141
      %s144 = sphi 0, %s143
      %s158 = sphi 0, %s144
      %s162 = sphi 0, %s162
      %s164 = sphi 0, %s162
      %s165 = sphi 0, %s164
      %s179 = sphi 0, %s165
      %s183 = sphi 0, %s183
      %s185 = sphi 0, %s183
      %s186 = sphi 0, %s185
      %s200 = sphi 0, %s186
      %s204 = sphi 0, %s204
      %s206 = sphi 0, %s204
      %s207 = sphi 0, %s206
      %s221 = sphi 0, %s207
      %s225 = sphi 0, %s225
      %s227 = sphi 0, %s225
      %s228 = sphi 0, %s227
      %s242 = sphi 0, %s228
      %s246 = sphi 0, %s246
      %s248 = sphi 0, %s246
      %s249 = sphi 0, %s248
      %s263 = sphi 0, %s249
      %s267 = sphi 0, %s267
      %s269 = sphi 0, %s267
      %s270 = sphi 0, %s269
      %s284 = sphi 0, %s270
      %s288 = sphi 0, %s288
      %s290 = sphi 0, %s288
      %s291 = sphi 0, %s290
      %s305 = sphi 0, %s291
      %s311 = sphi 0, %s313
      %s314 = sphi 0, %s311
      %s315 = sphi 0, %s314
      %s331 = sphi 0, %s315
    $region4: #{tpu_custom_call.1} parent=1 // loop_header_branch
      %26 = sbr.rel (%p24) target = $region8
    $region5: #{tpu_custom_call.1} parent=1 // loop_body
      %s28 = ssub.s32 %s23, 1
      %s29 = ssub.s32 %s23, 2
      %s30 = sadd.s32 %s23, 1
      %s31 = ssub.s32 %s23, %s30
      %p32 = scmp.eq.s32.totalorder %s31, 0
      %s34 = sadd.s32 %s33, 1
      %s35 = scalar_select %p32, %s33, %s34
      %p38 = pneg %p32
      %p39 = scmp.eq.s32.totalorder %s23, 1
      %p40 = por %p38, %p39
      %p41 = scmp.ne.s32.totalorder %s33, %s36
      %p42 = scmp.eq.s32.totalorder %s23, 0
      %p43 = por %p41, %p42
      %p44 = scmp.ne.s32.totalorder %s33, %s36
      %p45 = scmp.eq.s32.totalorder %s28, 1
      %p46 = por %p44, %p45
      %p47 = scmp.ne.s32.totalorder %s36, %s37
      %p48 = scmp.eq.s32.totalorder %s28, 0
      %p49 = por %p47, %p48
      %p50 = scmp.ne.s32.totalorder %s36, %s37
      %p51 = scmp.eq.s32.totalorder %s29, 1
      %p52 = por %p50, %p51
      %p54 = scmp.ne.s32.totalorder %s37, %s53
      %p55 = scmp.eq.s32.totalorder %s29, 0
      %p56 = por %p54, %p55
      %s58 = sadd.s32 %s57, 1
      %p61 = scmp.eq.s32.totalorder %s23, 1
      %p62 = scmp.ne.s32.totalorder %s57, %s59
      %p63 = scmp.eq.s32.totalorder %s23, 0
      %p64 = por %p62, %p63
      %p65 = scmp.ne.s32.totalorder %s57, %s59
      %p66 = scmp.eq.s32.totalorder %s28, 1
      %p67 = por %p65, %p66
      %p68 = scmp.ne.s32.totalorder %s59, %s60
      %p69 = scmp.eq.s32.totalorder %s28, 0
      %p70 = por %p68, %p69
      %p71 = scmp.ne.s32.totalorder %s59, %s60
      %p72 = scmp.eq.s32.totalorder %s29, 1
      %p73 = por %p71, %p72
      %p75 = scmp.ne.s32.totalorder %s60, %s74
      %p76 = scmp.eq.s32.totalorder %s29, 0
      %p77 = por %p75, %p76
      %s79 = sadd.s32 %s78, 1
      %p82 = scmp.eq.s32.totalorder %s23, 1
      %p83 = scmp.ne.s32.totalorder %s78, %s80
      %p84 = scmp.eq.s32.totalorder %s23, 0
      %p85 = por %p83, %p84
      %p86 = scmp.ne.s32.totalorder %s78, %s80
      %p87 = scmp.eq.s32.totalorder %s28, 1
      %p88 = por %p86, %p87
      %p89 = scmp.ne.s32.totalorder %s80, %s81
      %p90 = scmp.eq.s32.totalorder %s28, 0
      %p91 = por %p89, %p90
      %p92 = scmp.ne.s32.totalorder %s80, %s81
      %p93 = scmp.eq.s32.totalorder %s29, 1
      %p94 = por %p92, %p93
      %p96 = scmp.ne.s32.totalorder %s81, %s95
      %p97 = scmp.eq.s32.totalorder %s29, 0
      %p98 = por %p96, %p97
      %s100 = sadd.s32 %s99, 1
      %p103 = scmp.eq.s32.totalorder %s23, 1
      %p104 = scmp.ne.s32.totalorder %s99, %s101
      %p105 = scmp.eq.s32.totalorder %s23, 0
      %p106 = por %p104, %p105
      %p107 = scmp.ne.s32.totalorder %s99, %s101
      %p108 = scmp.eq.s32.totalorder %s28, 1
      %p109 = por %p107, %p108
      %p110 = scmp.ne.s32.totalorder %s101, %s102
      %p111 = scmp.eq.s32.totalorder %s28, 0
      %p112 = por %p110, %p111
      %p113 = scmp.ne.s32.totalorder %s101, %s102
      %p114 = scmp.eq.s32.totalorder %s29, 1
      %p115 = por %p113, %p114
      %p117 = scmp.ne.s32.totalorder %s102, %s116
      %p118 = scmp.eq.s32.totalorder %s29, 0
      %p119 = por %p117, %p118
      %s121 = sadd.s32 %s120, 1
      %p124 = scmp.eq.s32.totalorder %s23, 1
      %p125 = scmp.ne.s32.totalorder %s120, %s122
      %p126 = scmp.eq.s32.totalorder %s23, 0
      %p127 = por %p125, %p126
      %p128 = scmp.ne.s32.totalorder %s120, %s122
      %p129 = scmp.eq.s32.totalorder %s28, 1
      %p130 = por %p128, %p129
      %p131 = scmp.ne.s32.totalorder %s122, %s123
      %p132 = scmp.eq.s32.totalorder %s28, 0
      %p133 = por %p131, %p132
      %p134 = scmp.ne.s32.totalorder %s122, %s123
      %p135 = scmp.eq.s32.totalorder %s29, 1
      %p136 = por %p134, %p135
      %p138 = scmp.ne.s32.totalorder %s123, %s137
      %p139 = scmp.eq.s32.totalorder %s29, 0
      %p140 = por %p138, %p139
      %s142 = sadd.s32 %s141, 1
      %p145 = scmp.eq.s32.totalorder %s23, 1
      %p146 = scmp.ne.s32.totalorder %s141, %s143
      %p147 = scmp.eq.s32.totalorder %s23, 0
      %p148 = por %p146, %p147
      %p149 = scmp.ne.s32.totalorder %s141, %s143
      %p150 = scmp.eq.s32.totalorder %s28, 1
      %p151 = por %p149, %p150
      %p152 = scmp.ne.s32.totalorder %s143, %s144
      %p153 = scmp.eq.s32.totalorder %s28, 0
      %p154 = por %p152, %p153
      %p155 = scmp.ne.s32.totalorder %s143, %s144
      %p156 = scmp.eq.s32.totalorder %s29, 1
      %p157 = por %p155, %p156
      %p159 = scmp.ne.s32.totalorder %s144, %s158
      %p160 = scmp.eq.s32.totalorder %s29, 0
      %p161 = por %p159, %p160
      %s163 = sadd.s32 %s162, 1
      %p166 = scmp.eq.s32.totalorder %s23, 1
      %p167 = scmp.ne.s32.totalorder %s162, %s164
      %p168 = scmp.eq.s32.totalorder %s23, 0
      %p169 = por %p167, %p168
      %p170 = scmp.ne.s32.totalorder %s162, %s164
      %p171 = scmp.eq.s32.totalorder %s28, 1
      %p172 = por %p170, %p171
      %p173 = scmp.ne.s32.totalorder %s164, %s165
      %p174 = scmp.eq.s32.totalorder %s28, 0
      %p175 = por %p173, %p174
      %p176 = scmp.ne.s32.totalorder %s164, %s165
      %p177 = scmp.eq.s32.totalorder %s29, 1
      %p178 = por %p176, %p177
      %p180 = scmp.ne.s32.totalorder %s165, %s179
      %p181 = scmp.eq.s32.totalorder %s29, 0
      %p182 = por %p180, %p181
      %s184 = sadd.s32 %s183, 1
      %p187 = scmp.eq.s32.totalorder %s23, 1
      %p188 = scmp.ne.s32.totalorder %s183, %s185
      %p189 = scmp.eq.s32.totalorder %s23, 0
      %p190 = por %p188, %p189
      %p191 = scmp.ne.s32.totalorder %s183, %s185
      %p192 = scmp.eq.s32.totalorder %s28, 1
      %p193 = por %p191, %p192
      %p194 = scmp.ne.s32.totalorder %s185, %s186
      %p195 = scmp.eq.s32.totalorder %s28, 0
      %p196 = por %p194, %p195
      %p197 = scmp.ne.s32.totalorder %s185, %s186
      %p198 = scmp.eq.s32.totalorder %s29, 1
      %p199 = por %p197, %p198
      %p201 = scmp.ne.s32.totalorder %s186, %s200
      %p202 = scmp.eq.s32.totalorder %s29, 0
      %p203 = por %p201, %p202
      %s205 = sadd.s32 %s204, 1
      %p208 = scmp.eq.s32.totalorder %s23, 1
      %p209 = scmp.ne.s32.totalorder %s204, %s206
      %p210 = scmp.eq.s32.totalorder %s23, 0
      %p211 = por %p209, %p210
      %p212 = scmp.ne.s32.totalorder %s204, %s206
      %p213 = scmp.eq.s32.totalorder %s28, 1
      %p214 = por %p212, %p213
      %p215 = scmp.ne.s32.totalorder %s206, %s207
      %p216 = scmp.eq.s32.totalorder %s28, 0
      %p217 = por %p215, %p216
      %p218 = scmp.ne.s32.totalorder %s206, %s207
      %p219 = scmp.eq.s32.totalorder %s29, 1
      %p220 = por %p218, %p219
      %p222 = scmp.ne.s32.totalorder %s207, %s221
      %p223 = scmp.eq.s32.totalorder %s29, 0
      %p224 = por %p222, %p223
      %s226 = sadd.s32 %s225, 1
      %p229 = scmp.eq.s32.totalorder %s23, 1
      %p230 = scmp.ne.s32.totalorder %s225, %s227
      %p231 = scmp.eq.s32.totalorder %s23, 0
      %p232 = por %p230, %p231
      %p233 = scmp.ne.s32.totalorder %s225, %s227
      %p234 = scmp.eq.s32.totalorder %s28, 1
      %p235 = por %p233, %p234
      %p236 = scmp.ne.s32.totalorder %s227, %s228
      %p237 = scmp.eq.s32.totalorder %s28, 0
      %p238 = por %p236, %p237
      %p239 = scmp.ne.s32.totalorder %s227, %s228
      %p240 = scmp.eq.s32.totalorder %s29, 1
      %p241 = por %p239, %p240
      %p243 = scmp.ne.s32.totalorder %s228, %s242
      %p244 = scmp.eq.s32.totalorder %s29, 0
      %p245 = por %p243, %p244
      %s247 = sadd.s32 %s246, 1
      %p250 = scmp.eq.s32.totalorder %s23, 1
      %p251 = scmp.ne.s32.totalorder %s246, %s248
      %p252 = scmp.eq.s32.totalorder %s23, 0
      %p253 = por %p251, %p252
      %p254 = scmp.ne.s32.totalorder %s246, %s248
      %p255 = scmp.eq.s32.totalorder %s28, 1
      %p256 = por %p254, %p255
      %p257 = scmp.ne.s32.totalorder %s248, %s249
      %p258 = scmp.eq.s32.totalorder %s28, 0
      %p259 = por %p257, %p258
      %p260 = scmp.ne.s32.totalorder %s248, %s249
      %p261 = scmp.eq.s32.totalorder %s29, 1
      %p262 = por %p260, %p261
      %p264 = scmp.ne.s32.totalorder %s249, %s263
      %p265 = scmp.eq.s32.totalorder %s29, 0
      %p266 = por %p264, %p265
      %s268 = sadd.s32 %s267, 1
      %p271 = scmp.eq.s32.totalorder %s23, 1
      %p272 = scmp.ne.s32.totalorder %s267, %s269
      %p273 = scmp.eq.s32.totalorder %s23, 0
      %p274 = por %p272, %p273
      %p275 = scmp.ne.s32.totalorder %s267, %s269
      %p276 = scmp.eq.s32.totalorder %s28, 1
      %p277 = por %p275, %p276
      %p278 = scmp.ne.s32.totalorder %s269, %s270
      %p279 = scmp.eq.s32.totalorder %s28, 0
      %p280 = por %p278, %p279
      %p281 = scmp.ne.s32.totalorder %s269, %s270
      %p282 = scmp.eq.s32.totalorder %s29, 1
      %p283 = por %p281, %p282
      %p285 = scmp.ne.s32.totalorder %s270, %s284
      %p286 = scmp.eq.s32.totalorder %s29, 0
      %p287 = por %p285, %p286
      %s289 = sadd.s32 %s288, 1
      %p292 = scmp.eq.s32.totalorder %s23, 1
      %p293 = scmp.ne.s32.totalorder %s288, %s290
      %p294 = scmp.eq.s32.totalorder %s23, 0
      %p295 = por %p293, %p294
      %p296 = scmp.ne.s32.totalorder %s288, %s290
      %p297 = scmp.eq.s32.totalorder %s28, 1
      %p298 = por %p296, %p297
      %p299 = scmp.ne.s32.totalorder %s290, %s291
      %p300 = scmp.eq.s32.totalorder %s28, 0
      %p301 = por %p299, %p300
      %p302 = scmp.ne.s32.totalorder %s290, %s291
      %p303 = scmp.eq.s32.totalorder %s29, 1
      %p304 = por %p302, %p303
      %p306 = scmp.ne.s32.totalorder %s291, %s305
      %p307 = scmp.eq.s32.totalorder %s29, 0
      %p308 = por %p306, %p307
      %s309 = ssub.s32 %s23, %s30
      %p310 = scmp.eq.s32.totalorder %s309, 0
      %s312 = sadd.s32 %s311, 1
      %s313 = scalar_select %p310, %s311, %s312
      %p316 = pneg %p310
      %p317 = scmp.eq.s32.totalorder %s23, 1
      %p318 = por %p316, %p317
      %p319 = scmp.ne.s32.totalorder %s311, %s314
      %p320 = scmp.eq.s32.totalorder %s23, 0
      %p321 = por %p319, %p320
      %p322 = scmp.ne.s32.totalorder %s311, %s314
      %p323 = scmp.eq.s32.totalorder %s28, 1
      %p324 = por %p322, %p323
      %p325 = scmp.ne.s32.totalorder %s314, %s315
      %p326 = scmp.eq.s32.totalorder %s28, 0
      %p327 = por %p325, %p326
      %p328 = scmp.ne.s32.totalorder %s314, %s315
      %p329 = scmp.eq.s32.totalorder %s29, 1
      %p330 = por %p328, %p329
      %p332 = scmp.ne.s32.totalorder %s315, %s331
      %p333 = scmp.eq.s32.totalorder %s29, 0
      %p334 = por %p332, %p333
      %p335 = scmp.le.s32.totalorder 1, %s23
      %p336 = scmp.lt.s32.totalorder %s23, 3
      %p337 = pnand %p335, %p336
      %p338 = pneg %p337
      // Predicated region
      $region9: #{tpu_custom_call.1} parent=5 // pred_check
        _
      $region10: #{tpu_custom_call.1} parent=5 // pred_check_branch
        %340 = sbr.rel (%p337) target = $region12
      $region11: #{tpu_custom_call.1} parent=5 // pred_region
        %s341 = ssub.s32 %s23, 1
        // Predicated region
        $region13: #{tpu_custom_call.1} parent=11 // pred_check
          %p342 = pneg %p70
        $region14: #{tpu_custom_call.1} parent=11 // pred_check_branch
          %344 = sbr.rel (%p342) target = $region16
        $region15: #{tpu_custom_call.1} parent=11 // pred_region
          _
        $region16: #{tpu_custom_call.1} parent=11 // pred_fallthru
          _
        // Predicated region
        $region17: #{tpu_custom_call.1} parent=11 // pred_check
          %p345 = pneg %p91
        $region18: #{tpu_custom_call.1} parent=11 // pred_check_branch
          %347 = sbr.rel (%p345) target = $region20
        $region19: #{tpu_custom_call.1} parent=11 // pred_region
          _
        $region20: #{tpu_custom_call.1} parent=11 // pred_fallthru
          _
        // Predicated region
        $region21: #{tpu_custom_call.1} parent=11 // pred_check
          %p348 = pneg %p112
        $region22: #{tpu_custom_call.1} parent=11 // pred_check_branch
          %350 = sbr.rel (%p348) target = $region24
        $region23: #{tpu_custom_call.1} parent=11 // pred_region
          _
        $region24: #{tpu_custom_call.1} parent=11 // pred_fallthru
          _
        // Predicated region
        $region25: #{tpu_custom_call.1} parent=11 // pred_check
          %p351 = pneg %p133
        $region26: #{tpu_custom_call.1} parent=11 // pred_check_branch
          %353 = sbr.rel (%p351) target = $region28
        $region27: #{tpu_custom_call.1} parent=11 // pred_region
          _
        $region28: #{tpu_custom_call.1} parent=11 // pred_fallthru
          _
        // Predicated region
        $region29: #{tpu_custom_call.1} parent=11 // pred_check
          %p354 = pneg %p154
        $region30: #{tpu_custom_call.1} parent=11 // pred_check_branch
          %356 = sbr.rel (%p354) target = $region32
        $region31: #{tpu_custom_call.1} parent=11 // pred_region
          %s358 = ssub.s32 256, 256
          %359 = vsyncadd [#allocation3], %s358
          %s360 = sshll.u32 [#allocation2], 4
          %s361 = int_to_ptr.vmem [resolvable:$true] %s360
          %366 = dma.hbm_to_vmem [thread:$0]  %s5, 256, %s361, [#allocation3], 64, 64, 4
        $region32: #{tpu_custom_call.1} parent=11 // pred_fallthru
          _
        // Predicated region
        $region33: #{tpu_custom_call.1} parent=11 // pred_check
          %p367 = pneg %p175
        $region34: #{tpu_custom_call.1} parent=11 // pred_check_branch
          %369 = sbr.rel (%p367) target = $region36
        $region35: #{tpu_custom_call.1} parent=11 // pred_region
          _
        $region36: #{tpu_custom_call.1} parent=11 // pred_fallthru
          _
        // Predicated region
        $region37: #{tpu_custom_call.1} parent=11 // pred_check
          %p370 = pneg %p196
        $region38: #{tpu_custom_call.1} parent=11 // pred_check_branch
          %372 = sbr.rel (%p370) target = $region40
        $region39: #{tpu_custom_call.1} parent=11 // pred_region
          _
        $region40: #{tpu_custom_call.1} parent=11 // pred_fallthru
          _
        // Predicated region
        $region41: #{tpu_custom_call.1} parent=11 // pred_check
          %p373 = pneg %p217
        $region42: #{tpu_custom_call.1} parent=11 // pred_check_branch
          %375 = sbr.rel (%p373) target = $region44
        $region43: #{tpu_custom_call.1} parent=11 // pred_region
          _
        $region44: #{tpu_custom_call.1} parent=11 // pred_fallthru
          _
        // Predicated region
        $region45: #{tpu_custom_call.1} parent=11 // pred_check
          %p376 = pneg %p238
        $region46: #{tpu_custom_call.1} parent=11 // pred_check_branch
          %378 = sbr.rel (%p376) target = $region48
        $region47: #{tpu_custom_call.1} parent=11 // pred_region
          _
        $region48: #{tpu_custom_call.1} parent=11 // pred_fallthru
          _
        // Predicated region
        $region49: #{tpu_custom_call.1} parent=11 // pred_check
          %p379 = pneg %p259
        $region50: #{tpu_custom_call.1} parent=11 // pred_check_branch
          %381 = sbr.rel (%p379) target = $region52
        $region51: #{tpu_custom_call.1} parent=11 // pred_region
          _
        $region52: #{tpu_custom_call.1} parent=11 // pred_fallthru
          _
        // Predicated region
        $region53: #{tpu_custom_call.1} parent=11 // pred_check
          %p382 = pneg %p280
        $region54: #{tpu_custom_call.1} parent=11 // pred_check_branch
          %384 = sbr.rel (%p382) target = $region56
        $region55: #{tpu_custom_call.1} parent=11 // pred_region
          _
        $region56: #{tpu_custom_call.1} parent=11 // pred_fallthru
          _
        // Predicated region
        $region57: #{tpu_custom_call.1} parent=11 // pred_check
          %p385 = pneg %p301
        $region58: #{tpu_custom_call.1} parent=11 // pred_check_branch
          %387 = sbr.rel (%p385) target = $region60
        $region59: #{tpu_custom_call.1} parent=11 // pred_region
          _
        $region60: #{tpu_custom_call.1} parent=11 // pred_fallthru
          _
      $region12: #{tpu_custom_call.1} parent=5 // pred_fallthru
        _
      %p388 = scmp.lt.s32.totalorder %s23, 2
      // Predicated region
      $region61: #{tpu_custom_call.1} parent=5 // pred_check
        %p389 = pneg %p388
      $region62: #{tpu_custom_call.1} parent=5 // pred_check_branch
        %391 = sbr.rel (%p389) target = $region64
      $region63: #{tpu_custom_call.1} parent=5 // pred_region
        // Predicated region
        $region65: #{tpu_custom_call.1} parent=63 // pred_check
          %p392 = pneg %p43
        $region66: #{tpu_custom_call.1} parent=63 // pred_check_branch
          %394 = sbr.rel (%p392) target = $region68
        $region67: #{tpu_custom_call.1} parent=63 // pred_region
          %p395 = scmp.lt.s32.totalorder %s23, 1
          %s396 = scalar_select %p395, %s23, 1
          %s397 = smul.addr %s396, 8
          %s398 = scalar_lea.vmem %s0, %s397
        $region68: #{tpu_custom_call.1} parent=63 // pred_fallthru
          _
      $region64: #{tpu_custom_call.1} parent=5 // pred_fallthru
        _
      %p399 = scmp.le.s32.totalorder 1, %s23
      %p400 = scmp.lt.s32.totalorder %s23, 3
      %p401 = pnand %p399, %p400
      %p402 = pneg %p401
      // Predicated region
      $region69: #{tpu_custom_call.1} parent=5 // pred_check
        _
      $region70: #{tpu_custom_call.1} parent=5 // pred_check_branch
        %404 = sbr.rel (%p401) target = $region72
      $region71: #{tpu_custom_call.1} parent=5 // pred_region
        %s405 = ssub.s32 %s23, 1
        // Predicated region
        $region73: #{tpu_custom_call.1} parent=71 // pred_check
          %p406 = pneg %p154
        $region74: #{tpu_custom_call.1} parent=71 // pred_check_branch
          %408 = sbr.rel (%p406) target = $region76
        $region75: #{tpu_custom_call.1} parent=71 // pred_region
          %409 = dma.done [#allocation3], 256
        $region76: #{tpu_custom_call.1} parent=71 // pred_fallthru
          _
        %p410 = scmp.lt.s32.totalorder %s28, 1
        %s411 = scalar_select %p410, %s28, 1
        %s412 = smul.addr %s411, 8
        %s413 = scalar_lea.vmem %s0, %s412
        %p414 = pneg %p49
        %p415 = pneg %p46
        %p416 = pneg %p70
        %p417 = pneg %p67
        %p418 = pneg %p91
        %p419 = pneg %p88
        %p420 = pneg %p112
        %p421 = pneg %p109
        %p422 = pneg %p133
        %p423 = pneg %p130
        %p424 = pneg %p154
        %p425 = pneg %p151
        %p426 = pneg %p175
        %p427 = pneg %p172
        %p428 = pneg %p196
        %p429 = pneg %p193
        %p430 = pneg %p217
        %p431 = pneg %p214
        %p432 = pneg %p238
        %p433 = pneg %p235
        %p434 = pneg %p259
        %p435 = pneg %p256
        %p436 = pneg %p280
        %p437 = pneg %p277
        %p438 = pneg %p301
        %p439 = pneg %p298
        %p440 = pneg %p327
        %p441 = pneg %p324
        %s442 = sand.u32 %s314, 1
        %s443 = scalar_lea.sflag [#allocation4], %s442
        %s444 = sand.u32 %s314, 1
        %s445 = smul.addr %s444, 8
        %s446 = scalar_lea.vmem [#allocation5], %s445
        %p447 = scmp.lt.s32.totalorder %s28, 1
        %s448 = scalar_select %p447, %s28, 1
        %s449 = smul.addr %s448, 8
        %s450 = scalar_lea.vmem %s0, %s449
        %v452 = vld [vmem:[%s450] sm:$0xff]
        %v453 = vpack.c.bf16 %v452, %v452
        %v454 = vld [vmem:[%s1] sm:$0xf]
        %v455 = vld [vmem:[%s1 + $0x4] sm:$0xf]
        %v456 = vld [vmem:[%s1 + $0x8] sm:$0xf]
        %v457 = vld [vmem:[%s1 + $0xc] sm:$0xf]
        %v458 = vld [vmem:[%s2] sm:$0x1]
        %v460 = vlaneseq
        %v461 = vshrl.u32 %v460, 7
        %v462 = vsub.s32 0, %v461
        %v463 = vrot.slane %v458, %v462
        %v469 = vunpack.c.l.b16 %v454
        %v470 = vunpack.c.l.b16 %v455
        %v471 = vunpack.c.l.b16 %v456
        %v472 = vunpack.c.l.b16 %v457
        %v473 = vpack.c.b16 %v470, %v469
        %v474 = vpack.c.b16 %v472, %v471
        %vm477 = vcmask 261120
        %v479 = vsel %vm477, %v453, 0
        %481 = vmatprep.subr.bf16.mxu0 0
        %482 = vmatpush1.bf16.msra.mxu0 %v473
        %483 = vmatprep.subr.bf16.mxu0 0
        %484 = vmatpush1.bf16.msra.mxu0 %v474
        %485 = vmatprep.subr.bf16.mxu0 0
        %486 = vmatpush1.bf16.msra.mxu0 0
        %487 = vmatprep.subr.bf16.mxu0 0
        %488 = vmatpush1.bf16.msra.mxu0 0
        %489 = vmatprep.subr.bf16.mxu0 0
        %490 = vmatpush1.bf16.msra.mxu0 0
        %491 = vmatprep.subr.bf16.mxu0 0
        %492 = vmatpush1.bf16.msra.mxu0 0
        %493 = vmatprep.subr.bf16.mxu0 0
        %494 = vmatpush1.bf16.msra.mxu0 0
        %495 = vmatprep.subr.bf16.mxu0 0
        %496 = vmatpush1.bf16.msra.mxu0 0
        %497 = vmatprep.subr.bf16.mxu0 0
        %498 = vmatpush1.bf16.msra.mxu0 0
        %499 = vmatprep.subr.bf16.mxu0 0
        %500 = vmatpush1.bf16.msra.mxu0 0
        %501 = vmatprep.subr.bf16.mxu0 0
        %502 = vmatpush1.bf16.msra.mxu0 0
        %503 = vmatprep.subr.bf16.mxu0 0
        %504 = vmatpush1.bf16.msra.mxu0 0
        %505 = vmatprep.subr.bf16.mxu0 0
        %506 = vmatpush1.bf16.msra.mxu0 0
        %507 = vmatprep.subr.bf16.mxu0 0
        %508 = vmatpush1.bf16.msra.mxu0 0
        %509 = vmatprep.subr.bf16.mxu0 0
        %510 = vmatpush1.bf16.msra.mxu0 0
        %511 = vmatprep.subr.bf16.mxu0 0
        %512 = vmatpush1.bf16.msra.mxu0 0
        %513 = vmatprep.mubr.bf16.mxu0 0
        %514 = vmatmul.mubr.bf16.gmra.mrb[0].mxu0 %v479
        %v515 = vpop.f32.mrb[0].mxu0
        %v516 = vadd.f32 %v463, %v515
        %v517 = vpop.f32.mrb[0].mxu0
        %v518 = vpop.f32.mrb[0].mxu0
        %v519 = vpop.f32.mrb[0].mxu0
        %520 = vdwg.mxu0
        %v521 = vmul.f32 %v516, 0.35355338
        %v522 = vpack.c.bf16 %v521, %v521
        %v523 = vpack.c.bf16 %v516, %v516
        %525 = vrot.lane.b32.xlu0 %v523, 96
        %v526 = vpop.permute.xlu0 %525
        %vm527 = vcmask 64512
        %v529 = vsel %vm527, %v522, 0
        %v532 = vsel %vm527, %v526, 0
        %534 = vmatprep.subr.bf16.mxu0 0
        %535 = vmatpush1.bf16.xpose.msra.mxu0 %v532
        %536 = vmatprep.subr.bf16.mxu0 0
        %537 = vmatpush1.bf16.xpose.msra.mxu0 0
        %538 = vmatprep.subr.bf16.mxu0 0
        %539 = vmatpush1.bf16.xpose.msra.mxu0 0
        %540 = vmatprep.subr.bf16.mxu0 0
        %541 = vmatpush1.bf16.xpose.msra.mxu0 0
        %542 = vmatprep.subr.bf16.mxu0 0
        %543 = vmatpush1.bf16.xpose.msra.mxu0 0
        %544 = vmatprep.subr.bf16.mxu0 0
        %545 = vmatpush1.bf16.xpose.msra.mxu0 0
        %546 = vmatprep.subr.bf16.mxu0 0
        %547 = vmatpush1.bf16.xpose.msra.mxu0 0
        %548 = vmatprep.subr.bf16.mxu0 0
        %549 = vmatpush1.bf16.xpose.msra.mxu0 0
        %550 = vmatprep.subr.bf16.mxu0 0
        %551 = vmatpush1.bf16.xpose.msra.mxu0 0
        %552 = vmatprep.subr.bf16.mxu0 0
        %553 = vmatpush1.bf16.xpose.msra.mxu0 0
        %554 = vmatprep.subr.bf16.mxu0 0
        %555 = vmatpush1.bf16.xpose.msra.mxu0 0
        %556 = vmatprep.subr.bf16.mxu0 0
        %557 = vmatpush1.bf16.xpose.msra.mxu0 0
        %558 = vmatprep.subr.bf16.mxu0 0
        %559 = vmatpush1.bf16.xpose.msra.mxu0 0
        %560 = vmatprep.subr.bf16.mxu0 0
        %561 = vmatpush1.bf16.xpose.msra.mxu0 0
        %562 = vmatprep.subr.bf16.mxu0 0
        %563 = vmatpush1.bf16.xpose.msra.mxu0 0
        %564 = vmatprep.subr.bf16.mxu0 0
        %565 = vmatpush1.bf16.xpose.msra.mxu0 0
        %566 = vmatprep.mubr.bf16.mxu0 0
        %567 = vmatmul.mubr.bf16.gmra.mrb[0].mxu0 %v529
        %v568 = vpop.f32.mrb[0].mxu0
        %v569 = vadd.f32 0.0, %v568
        %v570 = vpop.f32.mrb[0].mxu0
        %v571 = vpop.f32.mrb[0].mxu0
        %v572 = vpop.f32.mrb[0].mxu0
        %573 = vdwg.mxu0
        %v574 = vsel %vm527, %v569, -inf
        %575 = vmax.xlane.f32.xlu0 %v574
        %v576 = vpop.xlane.xlu0 %575
        %v577 = vsub.f32 %v569, %v576
        %v578 = vmul.f32 %v577, 1.442695
        %v579 = vpow.pop %v578
        %v580 = vsel %vm527, %v579, 0.0
        %581 = vadd.xlane.f32.xlu0 %v580
        %v582 = vpop.xlane.xlu0 %581
        %v583 = vrcp.pop %v582
        %v584 = vmul.f32 %v579, %v583
        %v585 = vpack.c.bf16 %v584, %v584
        %586 = vrot.lane.b32.xlu0 %v523, 64
        %v587 = vpop.permute.xlu0 %586
        %v589 = vsel %vm527, %v585, 0
        %vm591 = vcmask 1043456
        %v593 = vsel %vm591, %v587, 0
        %595 = vmatprep.subr.bf16.mxu0 0
        %596 = vmatpush1.bf16.msra.mxu0 %v593
        %597 = vmatprep.subr.bf16.mxu0 0
        %598 = vmatpush1.bf16.msra.mxu0 0
        %599 = vmatprep.subr.bf16.mxu0 0
        %600 = vmatpush1.bf16.msra.mxu0 0
        %601 = vmatprep.subr.bf16.mxu0 0
        %602 = vmatpush1.bf16.msra.mxu0 0
        %603 = vmatprep.subr.bf16.mxu0 0
        %604 = vmatpush1.bf16.msra.mxu0 0
        %605 = vmatprep.subr.bf16.mxu0 0
        %606 = vmatpush1.bf16.msra.mxu0 0
        %607 = vmatprep.subr.bf16.mxu0 0
        %608 = vmatpush1.bf16.msra.mxu0 0
        %609 = vmatprep.subr.bf16.mxu0 0
        %610 = vmatpush1.bf16.msra.mxu0 0
        %611 = vmatprep.subr.bf16.mxu0 0
        %612 = vmatpush1.bf16.msra.mxu0 0
        %613 = vmatprep.subr.bf16.mxu0 0
        %614 = vmatpush1.bf16.msra.mxu0 0
        %615 = vmatprep.subr.bf16.mxu0 0
        %616 = vmatpush1.bf16.msra.mxu0 0
        %617 = vmatprep.subr.bf16.mxu0 0
        %618 = vmatpush1.bf16.msra.mxu0 0
        %619 = vmatprep.subr.bf16.mxu0 0
        %620 = vmatpush1.bf16.msra.mxu0 0
        %621 = vmatprep.subr.bf16.mxu0 0
        %622 = vmatpush1.bf16.msra.mxu0 0
        %623 = vmatprep.subr.bf16.mxu0 0
        %624 = vmatpush1.bf16.msra.mxu0 0
        %625 = vmatprep.subr.bf16.mxu0 0
        %626 = vmatpush1.bf16.msra.mxu0 0
        %627 = vmatprep.mubr.bf16.mxu0 0
        %628 = vmatmul.mubr.bf16.gmra.mrb[0].mxu0 %v589
        %v629 = vpop.f32.mrb[0].mxu0
        %v630 = vadd.f32 0.0, %v629
        %v631 = vpop.f32.mrb[0].mxu0
        %v632 = vpop.f32.mrb[0].mxu0
        %v633 = vpop.f32.mrb[0].mxu0
        %634 = vdwg.mxu0
        %v635 = vpack.c.bf16 %v630, %v630
        %v636 = vld [vmem:[%s3] sm:$0xf]
        %638 = vrot.lane.b32.xlu0 %v522, 120
        %v639 = vpop.permute.xlu0 %638
        %640 = vrot.lane.b32.xlu0 %v523, 88
        %v641 = vpop.permute.xlu0 %640
        %v643 = vsel %vm527, %v639, 0
        %v646 = vsel %vm527, %v641, 0
        %648 = vmatprep.subr.bf16.mxu0 0
        %649 = vmatpush1.bf16.xpose.msra.mxu0 %v646
        %650 = vmatprep.subr.bf16.mxu0 0
        %651 = vmatpush1.bf16.xpose.msra.mxu0 0
        %652 = vmatprep.subr.bf16.mxu0 0
        %653 = vmatpush1.bf16.xpose.msra.mxu0 0
        %654 = vmatprep.subr.bf16.mxu0 0
        %655 = vmatpush1.bf16.xpose.msra.mxu0 0
        %656 = vmatprep.subr.bf16.mxu0 0
        %657 = vmatpush1.bf16.xpose.msra.mxu0 0
        %658 = vmatprep.subr.bf16.mxu0 0
        %659 = vmatpush1.bf16.xpose.msra.mxu0 0
        %660 = vmatprep.subr.bf16.mxu0 0
        %661 = vmatpush1.bf16.xpose.msra.mxu0 0
        %662 = vmatprep.subr.bf16.mxu0 0
        %663 = vmatpush1.bf16.xpose.msra.mxu0 0
        %664 = vmatprep.subr.bf16.mxu0 0
        %665 = vmatpush1.bf16.xpose.msra.mxu0 0
        %666 = vmatprep.subr.bf16.mxu0 0
        %667 = vmatpush1.bf16.xpose.msra.mxu0 0
        %668 = vmatprep.subr.bf16.mxu0 0
        %669 = vmatpush1.bf16.xpose.msra.mxu0 0
        %670 = vmatprep.subr.bf16.mxu0 0
        %671 = vmatpush1.bf16.xpose.msra.mxu0 0
        %672 = vmatprep.subr.bf16.mxu0 0
        %673 = vmatpush1.bf16.xpose.msra.mxu0 0
        %674 = vmatprep.subr.bf16.mxu0 0
        %675 = vmatpush1.bf16.xpose.msra.mxu0 0
        %676 = vmatprep.subr.bf16.mxu0 0
        %677 = vmatpush1.bf16.xpose.msra.mxu0 0
        %678 = vmatprep.subr.bf16.mxu0 0
        %679 = vmatpush1.bf16.xpose.msra.mxu0 0
        %680 = vmatprep.mubr.bf16.mxu0 0
        %681 = vmatmul.mubr.bf16.gmra.mrb[0].mxu0 %v643
        %v682 = vpop.f32.mrb[0].mxu0
        %v683 = vadd.f32 0.0, %v682
        %v684 = vpop.f32.mrb[0].mxu0
        %v685 = vpop.f32.mrb[0].mxu0
        %v686 = vpop.f32.mrb[0].mxu0
        %687 = vdwg.mxu0
        %v688 = vsel %vm527, %v683, -inf
        %689 = vmax.xlane.f32.xlu0 %v688
        %v690 = vpop.xlane.xlu0 %689
        %v691 = vsub.f32 %v683, %v690
        %v692 = vmul.f32 %v691, 1.442695
        %v693 = vpow.pop %v692
        %v694 = vsel %vm527, %v693, 0.0
        %695 = vadd.xlane.f32.xlu0 %v694
        %v696 = vpop.xlane.xlu0 %695
        %v697 = vrcp.pop %v696
        %v698 = vmul.f32 %v693, %v697
        %v699 = vpack.c.bf16 %v698, %v698
        %700 = vrot.lane.b32.xlu0 %v523, 56
        %v701 = vpop.permute.xlu0 %700
        %v703 = vsel %vm527, %v699, 0
        %v706 = vsel %vm591, %v701, 0
        %708 = vmatprep.subr.bf16.mxu0 0
        %709 = vmatpush1.bf16.msra.mxu0 %v706
        %710 = vmatprep.subr.bf16.mxu0 0
        %711 = vmatpush1.bf16.msra.mxu0 0
        %712 = vmatprep.subr.bf16.mxu0 0
        %713 = vmatpush1.bf16.msra.mxu0 0
        %714 = vmatprep.subr.bf16.mxu0 0
        %715 = vmatpush1.bf16.msra.mxu0 0
        %716 = vmatprep.subr.bf16.mxu0 0
        %717 = vmatpush1.bf16.msra.mxu0 0
        %718 = vmatprep.subr.bf16.mxu0 0
        %719 = vmatpush1.bf16.msra.mxu0 0
        %720 = vmatprep.subr.bf16.mxu0 0
        %721 = vmatpush1.bf16.msra.mxu0 0
        %722 = vmatprep.subr.bf16.mxu0 0
        %723 = vmatpush1.bf16.msra.mxu0 0
        %724 = vmatprep.subr.bf16.mxu0 0
        %725 = vmatpush1.bf16.msra.mxu0 0
        %726 = vmatprep.subr.bf16.mxu0 0
        %727 = vmatpush1.bf16.msra.mxu0 0
        %728 = vmatprep.subr.bf16.mxu0 0
        %729 = vmatpush1.bf16.msra.mxu0 0
        %730 = vmatprep.subr.bf16.mxu0 0
        %731 = vmatpush1.bf16.msra.mxu0 0
        %732 = vmatprep.subr.bf16.mxu0 0
        %733 = vmatpush1.bf16.msra.mxu0 0
        %734 = vmatprep.subr.bf16.mxu0 0
        %735 = vmatpush1.bf16.msra.mxu0 0
        %736 = vmatprep.subr.bf16.mxu0 0
        %737 = vmatpush1.bf16.msra.mxu0 0
        %738 = vmatprep.subr.bf16.mxu0 0
        %739 = vmatpush1.bf16.msra.mxu0 0
        %740 = vmatprep.mubr.bf16.mxu0 0
        %741 = vmatmul.mubr.bf16.gmra.mrb[0].mxu0 %v703
        %v742 = vpop.f32.mrb[0].mxu0
        %v743 = vadd.f32 0.0, %v742
        %v744 = vpop.f32.mrb[0].mxu0
        %v745 = vpop.f32.mrb[0].mxu0
        %v746 = vpop.f32.mrb[0].mxu0
        %747 = vdwg.mxu0
        %v748 = vpack.c.bf16 %v743, %v743
        %v749 = vld [vmem:[%s3 + $0x4] sm:$0xf]
        %v751 = vsel %vm527, %v748, 0
        %v754 = vsel %vm591, %v749, 0
        %756 = vmatprep.subr.bf16.mxu0 0
        %757 = vmatpush1.bf16.msra.mxu0 %v754
        %758 = vmatprep.subr.bf16.mxu0 0
        %759 = vmatpush1.bf16.msra.mxu0 0
        %760 = vmatprep.subr.bf16.mxu0 0
        %761 = vmatpush1.bf16.msra.mxu0 0
        %762 = vmatprep.subr.bf16.mxu0 0
        %763 = vmatpush1.bf16.msra.mxu0 0
        %764 = vmatprep.subr.bf16.mxu0 0
        %765 = vmatpush1.bf16.msra.mxu0 0
        %766 = vmatprep.subr.bf16.mxu0 0
        %767 = vmatpush1.bf16.msra.mxu0 0
        %768 = vmatprep.subr.bf16.mxu0 0
        %769 = vmatpush1.bf16.msra.mxu0 0
        %770 = vmatprep.subr.bf16.mxu0 0
        %771 = vmatpush1.bf16.msra.mxu0 0
        %772 = vmatprep.subr.bf16.mxu0 0
        %773 = vmatpush1.bf16.msra.mxu0 0
        %774 = vmatprep.subr.bf16.mxu0 0
        %775 = vmatpush1.bf16.msra.mxu0 0
        %776 = vmatprep.subr.bf16.mxu0 0
        %777 = vmatpush1.bf16.msra.mxu0 0
        %778 = vmatprep.subr.bf16.mxu0 0
        %779 = vmatpush1.bf16.msra.mxu0 0
        %780 = vmatprep.subr.bf16.mxu0 0
        %781 = vmatpush1.bf16.msra.mxu0 0
        %782 = vmatprep.subr.bf16.mxu0 0
        %783 = vmatpush1.bf16.msra.mxu0 0
        %784 = vmatprep.subr.bf16.mxu0 0
        %785 = vmatpush1.bf16.msra.mxu0 0
        %786 = vmatprep.subr.bf16.mxu0 0
        %787 = vmatpush1.bf16.msra.mxu0 0
        %788 = vmatprep.mubr.bf16.mxu0 0
        %789 = vmatmul.mubr.bf16.gmra.mrb[0].mxu0 %v751
        %v790 = vpop.f32.mrb[0].mxu0
        %v791 = vadd.f32 0.0, %v790
        %v792 = vpop.f32.mrb[0].mxu0
        %v793 = vpop.f32.mrb[0].mxu0
        %v794 = vpop.f32.mrb[0].mxu0
        %795 = vdwg.mxu0
        %v797 = vsel %vm527, %v635, 0
        %v800 = vsel %vm591, %v636, 0
        %802 = vmatprep.subr.bf16.mxu0 0
        %803 = vmatpush1.bf16.msra.mxu0 %v800
        %804 = vmatprep.subr.bf16.mxu0 0
        %805 = vmatpush1.bf16.msra.mxu0 0
        %806 = vmatprep.subr.bf16.mxu0 0
        %807 = vmatpush1.bf16.msra.mxu0 0
        %808 = vmatprep.subr.bf16.mxu0 0
        %809 = vmatpush1.bf16.msra.mxu0 0
        %810 = vmatprep.subr.bf16.mxu0 0
        %811 = vmatpush1.bf16.msra.mxu0 0
        %812 = vmatprep.subr.bf16.mxu0 0
        %813 = vmatpush1.bf16.msra.mxu0 0
        %814 = vmatprep.subr.bf16.mxu0 0
        %815 = vmatpush1.bf16.msra.mxu0 0
        %816 = vmatprep.subr.bf16.mxu0 0
        %817 = vmatpush1.bf16.msra.mxu0 0
        %818 = vmatprep.subr.bf16.mxu0 0
        %819 = vmatpush1.bf16.msra.mxu0 0
        %820 = vmatprep.subr.bf16.mxu0 0
        %821 = vmatpush1.bf16.msra.mxu0 0
        %822 = vmatprep.subr.bf16.mxu0 0
        %823 = vmatpush1.bf16.msra.mxu0 0
        %824 = vmatprep.subr.bf16.mxu0 0
        %825 = vmatpush1.bf16.msra.mxu0 0
        %826 = vmatprep.subr.bf16.mxu0 0
        %827 = vmatpush1.bf16.msra.mxu0 0
        %828 = vmatprep.subr.bf16.mxu0 0
        %829 = vmatpush1.bf16.msra.mxu0 0
        %830 = vmatprep.subr.bf16.mxu0 0
        %831 = vmatpush1.bf16.msra.mxu0 0
        %832 = vmatprep.subr.bf16.mxu0 0
        %833 = vmatpush1.bf16.msra.mxu0 0
        %834 = vmatprep.mubr.bf16.mxu0 0
        %835 = vmatmul.mubr.bf16.gmra.mrb[0].mxu0 %v797
        %v836 = vpop.f32.mrb[0].mxu0
        %v837 = vadd.f32 %v791, %v836
        %v838 = vpop.f32.mrb[0].mxu0
        %v839 = vpop.f32.mrb[0].mxu0
        %v840 = vpop.f32.mrb[0].mxu0
        %841 = vdwg.mxu0
        %842 = vrot.lane.b32.xlu0 %v522, 112
        %v843 = vpop.permute.xlu0 %842
        %844 = vrot.lane.b32.xlu0 %v523, 80
        %v845 = vpop.permute.xlu0 %844
        %v847 = vsel %vm527, %v843, 0
        %v850 = vsel %vm527, %v845, 0
        %852 = vmatprep.subr.bf16.mxu0 0
        %853 = vmatpush1.bf16.xpose.msra.mxu0 %v850
        %854 = vmatprep.subr.bf16.mxu0 0
        %855 = vmatpush1.bf16.xpose.msra.mxu0 0
        %856 = vmatprep.subr.bf16.mxu0 0
        %857 = vmatpush1.bf16.xpose.msra.mxu0 0
        %858 = vmatprep.subr.bf16.mxu0 0
        %859 = vmatpush1.bf16.xpose.msra.mxu0 0
        %860 = vmatprep.subr.bf16.mxu0 0
        %861 = vmatpush1.bf16.xpose.msra.mxu0 0
        %862 = vmatprep.subr.bf16.mxu0 0
        %863 = vmatpush1.bf16.xpose.msra.mxu0 0
        %864 = vmatprep.subr.bf16.mxu0 0
        %865 = vmatpush1.bf16.xpose.msra.mxu0 0
        %866 = vmatprep.subr.bf16.mxu0 0
        %867 = vmatpush1.bf16.xpose.msra.mxu0 0
        %868 = vmatprep.subr.bf16.mxu0 0
        %869 = vmatpush1.bf16.xpose.msra.mxu0 0
        %870 = vmatprep.subr.bf16.mxu0 0
        %871 = vmatpush1.bf16.xpose.msra.mxu0 0
        %872 = vmatprep.subr.bf16.mxu0 0
        %873 = vmatpush1.bf16.xpose.msra.mxu0 0
        %874 = vmatprep.subr.bf16.mxu0 0
        %875 = vmatpush1.bf16.xpose.msra.mxu0 0
        %876 = vmatprep.subr.bf16.mxu0 0
        %877 = vmatpush1.bf16.xpose.msra.mxu0 0
        %878 = vmatprep.subr.bf16.mxu0 0
        %879 = vmatpush1.bf16.xpose.msra.mxu0 0
        %880 = vmatprep.subr.bf16.mxu0 0
        %881 = vmatpush1.bf16.xpose.msra.mxu0 0
        %882 = vmatprep.subr.bf16.mxu0 0
        %883 = vmatpush1.bf16.xpose.msra.mxu0 0
        %884 = vmatprep.mubr.bf16.mxu0 0
        %885 = vmatmul.mubr.bf16.gmra.mrb[0].mxu0 %v847
        %v886 = vpop.f32.mrb[0].mxu0
        %v887 = vadd.f32 0.0, %v886
        %v888 = vpop.f32.mrb[0].mxu0
        %v889 = vpop.f32.mrb[0].mxu0
        %v890 = vpop.f32.mrb[0].mxu0
        %891 = vdwg.mxu0
        %v892 = vsel %vm527, %v887, -inf
        %893 = vmax.xlane.f32.xlu0 %v892
        %v894 = vpop.xlane.xlu0 %893
        %v895 = vsub.f32 %v887, %v894
        %v896 = vmul.f32 %v895, 1.442695
        %v897 = vpow.pop %v896
        %v898 = vsel %vm527, %v897, 0.0
        %899 = vadd.xlane.f32.xlu0 %v898
        %v900 = vpop.xlane.xlu0 %899
        %v901 = vrcp.pop %v900
        %v902 = vmul.f32 %v897, %v901
        %v903 = vpack.c.bf16 %v902, %v902
        %904 = vrot.lane.b32.xlu0 %v523, 48
        %v905 = vpop.permute.xlu0 %904
        %v907 = vsel %vm527, %v903, 0
        %v910 = vsel %vm591, %v905, 0
        %912 = vmatprep.subr.bf16.mxu0 0
        %913 = vmatpush1.bf16.msra.mxu0 %v910
        %914 = vmatprep.subr.bf16.mxu0 0
        %915 = vmatpush1.bf16.msra.mxu0 0
        %916 = vmatprep.subr.bf16.mxu0 0
        %917 = vmatpush1.bf16.msra.mxu0 0
        %918 = vmatprep.subr.bf16.mxu0 0
        %919 = vmatpush1.bf16.msra.mxu0 0
        %920 = vmatprep.subr.bf16.mxu0 0
        %921 = vmatpush1.bf16.msra.mxu0 0
        %922 = vmatprep.subr.bf16.mxu0 0
        %923 = vmatpush1.bf16.msra.mxu0 0
        %924 = vmatprep.subr.bf16.mxu0 0
        %925 = vmatpush1.bf16.msra.mxu0 0
        %926 = vmatprep.subr.bf16.mxu0 0
        %927 = vmatpush1.bf16.msra.mxu0 0
        %928 = vmatprep.subr.bf16.mxu0 0
        %929 = vmatpush1.bf16.msra.mxu0 0
        %930 = vmatprep.subr.bf16.mxu0 0
        %931 = vmatpush1.bf16.msra.mxu0 0
        %932 = vmatprep.subr.bf16.mxu0 0
        %933 = vmatpush1.bf16.msra.mxu0 0
        %934 = vmatprep.subr.bf16.mxu0 0
        %935 = vmatpush1.bf16.msra.mxu0 0
        %936 = vmatprep.subr.bf16.mxu0 0
        %937 = vmatpush1.bf16.msra.mxu0 0
        %938 = vmatprep.subr.bf16.mxu0 0
        %939 = vmatpush1.bf16.msra.mxu0 0
        %940 = vmatprep.subr.bf16.mxu0 0
        %941 = vmatpush1.bf16.msra.mxu0 0
        %942 = vmatprep.subr.bf16.mxu0 0
        %943 = vmatpush1.bf16.msra.mxu0 0
        %944 = vmatprep.mubr.bf16.mxu0 0
        %945 = vmatmul.mubr.bf16.gmra.mrb[0].mxu0 %v907
        %v946 = vpop.f32.mrb[0].mxu0
        %v947 = vadd.f32 0.0, %v946
        %v948 = vpop.f32.mrb[0].mxu0
        %v949 = vpop.f32.mrb[0].mxu0
        %v950 = vpop.f32.mrb[0].mxu0
        %951 = vdwg.mxu0
        %v952 = vpack.c.bf16 %v947, %v947
        %v953 = vld [vmem:[%s3 + $0x8] sm:$0xf]
        %v955 = vsel %vm527, %v952, 0
        %v958 = vsel %vm591, %v953, 0
        %960 = vmatprep.subr.bf16.mxu0 0
        %961 = vmatpush1.bf16.msra.mxu0 %v958
        %962 = vmatprep.subr.bf16.mxu0 0
        %963 = vmatpush1.bf16.msra.mxu0 0
        %964 = vmatprep.subr.bf16.mxu0 0
        %965 = vmatpush1.bf16.msra.mxu0 0
        %966 = vmatprep.subr.bf16.mxu0 0
        %967 = vmatpush1.bf16.msra.mxu0 0
        %968 = vmatprep.subr.bf16.mxu0 0
        %969 = vmatpush1.bf16.msra.mxu0 0
        %970 = vmatprep.subr.bf16.mxu0 0
        %971 = vmatpush1.bf16.msra.mxu0 0
        %972 = vmatprep.subr.bf16.mxu0 0
        %973 = vmatpush1.bf16.msra.mxu0 0
        %974 = vmatprep.subr.bf16.mxu0 0
        %975 = vmatpush1.bf16.msra.mxu0 0
        %976 = vmatprep.subr.bf16.mxu0 0
        %977 = vmatpush1.bf16.msra.mxu0 0
        %978 = vmatprep.subr.bf16.mxu0 0
        %979 = vmatpush1.bf16.msra.mxu0 0
        %980 = vmatprep.subr.bf16.mxu0 0
        %981 = vmatpush1.bf16.msra.mxu0 0
        %982 = vmatprep.subr.bf16.mxu0 0
        %983 = vmatpush1.bf16.msra.mxu0 0
        %984 = vmatprep.subr.bf16.mxu0 0
        %985 = vmatpush1.bf16.msra.mxu0 0
        %986 = vmatprep.subr.bf16.mxu0 0
        %987 = vmatpush1.bf16.msra.mxu0 0
        %988 = vmatprep.subr.bf16.mxu0 0
        %989 = vmatpush1.bf16.msra.mxu0 0
        %990 = vmatprep.subr.bf16.mxu0 0
        %991 = vmatpush1.bf16.msra.mxu0 0
        %992 = vmatprep.mubr.bf16.mxu0 0
        %993 = vmatmul.mubr.bf16.gmra.mrb[0].mxu0 %v955
        %v994 = vpop.f32.mrb[0].mxu0
        %v995 = vadd.f32 0.0, %v994
        %v996 = vpop.f32.mrb[0].mxu0
        %v997 = vpop.f32.mrb[0].mxu0
        %v998 = vpop.f32.mrb[0].mxu0
        %999 = vdwg.mxu0
        %v1000 = vadd.f32 %v837, %v995
        %1001 = vrot.lane.b32.xlu0 %v522, 104
        %v1002 = vpop.permute.xlu0 %1001
        %1003 = vrot.lane.b32.xlu0 %v523, 72
        %v1004 = vpop.permute.xlu0 %1003
        %v1006 = vsel %vm527, %v1002, 0
        %v1009 = vsel %vm527, %v1004, 0
        %1011 = vmatprep.subr.bf16.mxu0 0
        %1012 = vmatpush1.bf16.xpose.msra.mxu0 %v1009
        %1013 = vmatprep.subr.bf16.mxu0 0
        %1014 = vmatpush1.bf16.xpose.msra.mxu0 0
        %1015 = vmatprep.subr.bf16.mxu0 0
        %1016 = vmatpush1.bf16.xpose.msra.mxu0 0
        %1017 = vmatprep.subr.bf16.mxu0 0
        %1018 = vmatpush1.bf16.xpose.msra.mxu0 0
        %1019 = vmatprep.subr.bf16.mxu0 0
        %1020 = vmatpush1.bf16.xpose.msra.mxu0 0
        %1021 = vmatprep.subr.bf16.mxu0 0
        %1022 = vmatpush1.bf16.xpose.msra.mxu0 0
        %1023 = vmatprep.subr.bf16.mxu0 0
        %1024 = vmatpush1.bf16.xpose.msra.mxu0 0
        %1025 = vmatprep.subr.bf16.mxu0 0
        %1026 = vmatpush1.bf16.xpose.msra.mxu0 0
        %1027 = vmatprep.subr.bf16.mxu0 0
        %1028 = vmatpush1.bf16.xpose.msra.mxu0 0
        %1029 = vmatprep.subr.bf16.mxu0 0
        %1030 = vmatpush1.bf16.xpose.msra.mxu0 0
        %1031 = vmatprep.subr.bf16.mxu0 0
        %1032 = vmatpush1.bf16.xpose.msra.mxu0 0
        %1033 = vmatprep.subr.bf16.mxu0 0
        %1034 = vmatpush1.bf16.xpose.msra.mxu0 0
        %1035 = vmatprep.subr.bf16.mxu0 0
        %1036 = vmatpush1.bf16.xpose.msra.mxu0 0
        %1037 = vmatprep.subr.bf16.mxu0 0
        %1038 = vmatpush1.bf16.xpose.msra.mxu0 0
        %1039 = vmatprep.subr.bf16.mxu0 0
        %1040 = vmatpush1.bf16.xpose.msra.mxu0 0
        %1041 = vmatprep.subr.bf16.mxu0 0
        %1042 = vmatpush1.bf16.xpose.msra.mxu0 0
        %1043 = vmatprep.mubr.bf16.mxu0 0
        %1044 = vmatmul.mubr.bf16.gmra.mrb[0].mxu0 %v1006
        %v1045 = vpop.f32.mrb[0].mxu0
        %v1046 = vadd.f32 0.0, %v1045
        %v1047 = vpop.f32.mrb[0].mxu0
        %v1048 = vpop.f32.mrb[0].mxu0
        %v1049 = vpop.f32.mrb[0].mxu0
        %1050 = vdwg.mxu0
        %v1051 = vsel %vm527, %v1046, -inf
        %1052 = vmax.xlane.f32.xlu0 %v1051
        %v1053 = vpop.xlane.xlu0 %1052
        %v1054 = vsub.f32 %v1046, %v1053
        %v1055 = vmul.f32 %v1054, 1.442695
        %v1056 = vpow.pop %v1055
        %v1057 = vsel %vm527, %v1056, 0.0
        %1058 = vadd.xlane.f32.xlu0 %v1057
        %v1059 = vpop.xlane.xlu0 %1058
        %v1060 = vrcp.pop %v1059
        %v1061 = vmul.f32 %v1056, %v1060
        %v1062 = vpack.c.bf16 %v1061, %v1061
        %1063 = vrot.lane.b32.xlu0 %v523, 40
        %v1064 = vpop.permute.xlu0 %1063
        %v1066 = vsel %vm527, %v1062, 0
        %v1069 = vsel %vm591, %v1064, 0
        %1071 = vmatprep.subr.bf16.mxu0 0
        %1072 = vmatpush1.bf16.msra.mxu0 %v1069
        %1073 = vmatprep.subr.bf16.mxu0 0
        %1074 = vmatpush1.bf16.msra.mxu0 0
        %1075 = vmatprep.subr.bf16.mxu0 0
        %1076 = vmatpush1.bf16.msra.mxu0 0
        %1077 = vmatprep.subr.bf16.mxu0 0
        %1078 = vmatpush1.bf16.msra.mxu0 0
        %1079 = vmatprep.subr.bf16.mxu0 0
        %1080 = vmatpush1.bf16.msra.mxu0 0
        %1081 = vmatprep.subr.bf16.mxu0 0
        %1082 = vmatpush1.bf16.msra.mxu0 0
        %1083 = vmatprep.subr.bf16.mxu0 0
        %1084 = vmatpush1.bf16.msra.mxu0 0
        %1085 = vmatprep.subr.bf16.mxu0 0
        %1086 = vmatpush1.bf16.msra.mxu0 0
        %1087 = vmatprep.subr.bf16.mxu0 0
        %1088 = vmatpush1.bf16.msra.mxu0 0
        %1089 = vmatprep.subr.bf16.mxu0 0
        %1090 = vmatpush1.bf16.msra.mxu0 0
        %1091 = vmatprep.subr.bf16.mxu0 0
        %1092 = vmatpush1.bf16.msra.mxu0 0
        %1093 = vmatprep.subr.bf16.mxu0 0
        %1094 = vmatpush1.bf16.msra.mxu0 0
        %1095 = vmatprep.subr.bf16.mxu0 0
        %1096 = vmatpush1.bf16.msra.mxu0 0
        %1097 = vmatprep.subr.bf16.mxu0 0
        %1098 = vmatpush1.bf16.msra.mxu0 0
        %1099 = vmatprep.subr.bf16.mxu0 0
        %1100 = vmatpush1.bf16.msra.mxu0 0
        %1101 = vmatprep.subr.bf16.mxu0 0
        %1102 = vmatpush1.bf16.msra.mxu0 0
        %1103 = vmatprep.mubr.bf16.mxu0 0
        %1104 = vmatmul.mubr.bf16.gmra.mrb[0].mxu0 %v1066
        %v1105 = vpop.f32.mrb[0].mxu0
        %v1106 = vadd.f32 0.0, %v1105
        %v1107 = vpop.f32.mrb[0].mxu0
        %v1108 = vpop.f32.mrb[0].mxu0
        %v1109 = vpop.f32.mrb[0].mxu0
        %1110 = vdwg.mxu0
        %v1111 = vpack.c.bf16 %v1106, %v1106
        %v1112 = vld [vmem:[%s3 + $0xc] sm:$0xf]
        %v1114 = vsel %vm527, %v1111, 0
        %v1117 = vsel %vm591, %v1112, 0
        %1119 = vmatprep.subr.bf16.mxu0 0
        %1120 = vmatpush1.bf16.msra.mxu0 %v1117
        %1121 = vmatprep.subr.bf16.mxu0 0
        %1122 = vmatpush1.bf16.msra.mxu0 0
        %1123 = vmatprep.subr.bf16.mxu0 0
        %1124 = vmatpush1.bf16.msra.mxu0 0
        %1125 = vmatprep.subr.bf16.mxu0 0
        %1126 = vmatpush1.bf16.msra.mxu0 0
        %1127 = vmatprep.subr.bf16.mxu0 0
        %1128 = vmatpush1.bf16.msra.mxu0 0
        %1129 = vmatprep.subr.bf16.mxu0 0
        %1130 = vmatpush1.bf16.msra.mxu0 0
        %1131 = vmatprep.subr.bf16.mxu0 0
        %1132 = vmatpush1.bf16.msra.mxu0 0
        %1133 = vmatprep.subr.bf16.mxu0 0
        %1134 = vmatpush1.bf16.msra.mxu0 0
        %1135 = vmatprep.subr.bf16.mxu0 0
        %1136 = vmatpush1.bf16.msra.mxu0 0
        %1137 = vmatprep.subr.bf16.mxu0 0
        %1138 = vmatpush1.bf16.msra.mxu0 0
        %1139 = vmatprep.subr.bf16.mxu0 0
        %1140 = vmatpush1.bf16.msra.mxu0 0
        %1141 = vmatprep.subr.bf16.mxu0 0
        %1142 = vmatpush1.bf16.msra.mxu0 0
        %1143 = vmatprep.subr.bf16.mxu0 0
        %1144 = vmatpush1.bf16.msra.mxu0 0
        %1145 = vmatprep.subr.bf16.mxu0 0
        %1146 = vmatpush1.bf16.msra.mxu0 0
        %1147 = vmatprep.subr.bf16.mxu0 0
        %1148 = vmatpush1.bf16.msra.mxu0 0
        %1149 = vmatprep.subr.bf16.mxu0 0
        %1150 = vmatpush1.bf16.msra.mxu0 0
        %1151 = vmatprep.mubr.bf16.mxu0 0
        %1152 = vmatmul.mubr.bf16.gmra.mrb[0].mxu0 %v1114
        %v1153 = vpop.f32.mrb[0].mxu0
        %v1154 = vadd.f32 0.0, %v1153
        %v1155 = vpop.f32.mrb[0].mxu0
        %v1156 = vpop.f32.mrb[0].mxu0
        %v1157 = vpop.f32.mrb[0].mxu0
        %1158 = vdwg.mxu0
        %v1159 = vadd.f32 %v1000, %v1154
        %v1160 = vld [vmem:[%s4] sm:$0x1]
        %v1162 = vlaneseq
        %v1163 = vshrl.u32 %v1162, 7
        %v1164 = vsub.s32 0, %v1163
        %v1165 = vrot.slane %v1160, %v1164
        %v1167 = vadd.f32 %v1159, %v1165
        %v1168 = vadd.f32 %v1167, %v1167
        %v1169 = vsel %vm477, %v1168, 0.0
        %1170 = vadd.xlane.f32.xlu0 %v1169
        %v1171 = vpop.xlane.xlu0 %1170
        %v1172 = vrcp.pop 32.0
        %v1173 = vmul.f32 %v1171, %v1172
        %v1174 = vsub.f32 %v1168, %v1173
        %v1175 = vmul.f32 %v1174, %v1174
        %v1176 = vsel %vm477, %v1175, 0.0
        %1177 = vadd.xlane.f32.xlu0 %v1176
        %v1178 = vpop.xlane.xlu0 %1177
        %v1179 = vmul.f32 %v1178, %v1172
        %v1180 = vadd.f32 %v1179, 1e-05
        %v1181 = vrsqrt.pop %v1180
        %v1182 = vmul.f32 %v1174, %v1181
        %v1183 = vld [vmem:[%s9] sm:$0x1]
        %v1185 = vlaneseq
        %v1186 = vshrl.u32 %v1185, 7
        %v1187 = vsub.s32 0, %v1186
        %v1188 = vrot.slane %v1183, %v1187
        %v1190 = vmul.f32 %v1182, %v1188
        %v1191 = vld [vmem:[%s10] sm:$0x1]
        %v1193 = vlaneseq
        %v1194 = vshrl.u32 %v1193, 7
        %v1195 = vsub.s32 0, %v1194
        %v1196 = vrot.slane %v1191, %v1195
        %v1198 = vadd.f32 %v1190, %v1196
        %v1199 = vpack.c.bf16 %v1198, %v1198
        %v1200 = vld [vmem:[#allocation2] sm:$0xf]
        %v1201 = vld [vmem:[#allocation2 + $0x4] sm:$0xf]
        %v1202 = vld [vmem:[#allocation2 + $0x8] sm:$0xf]
        %v1203 = vld [vmem:[#allocation2 + $0xc] sm:$0xf]
        %v1204 = vld [vmem:[%s6] sm:$0x1]
        %v1206 = vlaneseq
        %v1207 = vshrl.u32 %v1206, 7
        %v1208 = vsub.s32 0, %v1207
        %v1209 = vrot.slane %v1204, %v1208
        %v1215 = vunpack.c.l.b16 %v1200
        %v1216 = vunpack.c.l.b16 %v1201
        %v1217 = vunpack.c.l.b16 %v1202
        %v1218 = vunpack.c.l.b16 %v1203
        %v1219 = vpack.c.b16 %v1216, %v1215
        %v1220 = vpack.c.b16 %v1218, %v1217
        %v1224 = vsel %vm477, %v1199, 0
        %1226 = vmatprep.subr.bf16.mxu0 0
        %1227 = vmatpush1.bf16.msra.mxu0 %v1219
        %1228 = vmatprep.subr.bf16.mxu0 0
        %1229 = vmatpush1.bf16.msra.mxu0 %v1220
        %1230 = vmatprep.subr.bf16.mxu0 0
        %1231 = vmatpush1.bf16.msra.mxu0 0
        %1232 = vmatprep.subr.bf16.mxu0 0
        %1233 = vmatpush1.bf16.msra.mxu0 0
        %1234 = vmatprep.subr.bf16.mxu0 0
        %1235 = vmatpush1.bf16.msra.mxu0 0
        %1236 = vmatprep.subr.bf16.mxu0 0
        %1237 = vmatpush1.bf16.msra.mxu0 0
        %1238 = vmatprep.subr.bf16.mxu0 0
        %1239 = vmatpush1.bf16.msra.mxu0 0
        %1240 = vmatprep.subr.bf16.mxu0 0
        %1241 = vmatpush1.bf16.msra.mxu0 0
        %1242 = vmatprep.subr.bf16.mxu0 0
        %1243 = vmatpush1.bf16.msra.mxu0 0
        %1244 = vmatprep.subr.bf16.mxu0 0
        %1245 = vmatpush1.bf16.msra.mxu0 0
        %1246 = vmatprep.subr.bf16.mxu0 0
        %1247 = vmatpush1.bf16.msra.mxu0 0
        %1248 = vmatprep.subr.bf16.mxu0 0
        %1249 = vmatpush1.bf16.msra.mxu0 0
        %1250 = vmatprep.subr.bf16.mxu0 0
        %1251 = vmatpush1.bf16.msra.mxu0 0
        %1252 = vmatprep.subr.bf16.mxu0 0
        %1253 = vmatpush1.bf16.msra.mxu0 0
        %1254 = vmatprep.subr.bf16.mxu0 0
        %1255 = vmatpush1.bf16.msra.mxu0 0
        %1256 = vmatprep.subr.bf16.mxu0 0
        %1257 = vmatpush1.bf16.msra.mxu0 0
        %1258 = vmatprep.mubr.bf16.mxu0 0
        %1259 = vmatmul.mubr.bf16.gmra.mrb[0].mxu0 %v1224
        %v1260 = vpop.f32.mrb[0].mxu0
        %v1261 = vadd.f32 %v1209, %v1260
        %v1262 = vpop.f32.mrb[0].mxu0
        %v1263 = vpop.f32.mrb[0].mxu0
        %v1264 = vpop.f32.mrb[0].mxu0
        %1265 = vdwg.mxu0
        %v1266 = vmax.f32 %v1261, 0.0
        %v1267 = vpack.c.bf16 %v1266, %v1266
        %v1268 = vld [vmem:[%s7] sm:$0xf]
        %v1269 = vld [vmem:[%s7 + $0x4] sm:$0xf]
        %v1270 = vld [vmem:[%s7 + $0x8] sm:$0xf]
        %v1271 = vld [vmem:[%s7 + $0xc] sm:$0xf]
        %v1272 = vld [vmem:[%s7 + $0x10] sm:$0xf]
        %v1273 = vld [vmem:[%s7 + $0x14] sm:$0xf]
        %v1274 = vld [vmem:[%s7 + $0x18] sm:$0xf]
        %v1275 = vld [vmem:[%s7 + $0x1c] sm:$0xf]
        %v1276 = vld [vmem:[%s8] sm:$0x1]
        %v1278 = vlaneseq
        %v1279 = vshrl.u32 %v1278, 7
        %v1280 = vsub.s32 0, %v1279
        %v1281 = vrot.slane %v1276, %v1280
        %v1291 = vunpack.c.l.b16 %v1268
        %v1292 = vunpack.c.l.b16 %v1269
        %v1293 = vunpack.c.l.b16 %v1270
        %v1294 = vunpack.c.l.b16 %v1271
        %v1295 = vunpack.c.l.b16 %v1272
        %v1296 = vunpack.c.l.b16 %v1273
        %v1297 = vunpack.c.l.b16 %v1274
        %v1298 = vunpack.c.l.b16 %v1275
        %v1299 = vpack.c.b16 %v1292, %v1291
        %v1300 = vpack.c.b16 %v1294, %v1293
        %v1301 = vpack.c.b16 %v1296, %v1295
        %v1302 = vpack.c.b16 %v1298, %v1297
        %vm1307 = vcmask 523264
        %v1309 = vsel %vm1307, %v1267, 0
        %1311 = vmatprep.subr.bf16.mxu0 0
        %1312 = vmatpush1.bf16.msra.mxu0 %v1299
        %1313 = vmatprep.subr.bf16.mxu0 0
        %1314 = vmatpush1.bf16.msra.mxu0 %v1300
        %1315 = vmatprep.subr.bf16.mxu0 0
        %1316 = vmatpush1.bf16.msra.mxu0 %v1301
        %1317 = vmatprep.subr.bf16.mxu0 0
        %1318 = vmatpush1.bf16.msra.mxu0 %v1302
        %1319 = vmatprep.subr.bf16.mxu0 0
        %1320 = vmatpush1.bf16.msra.mxu0 0
        %1321 = vmatprep.subr.bf16.mxu0 0
        %1322 = vmatpush1.bf16.msra.mxu0 0
        %1323 = vmatprep.subr.bf16.mxu0 0
        %1324 = vmatpush1.bf16.msra.mxu0 0
        %1325 = vmatprep.subr.bf16.mxu0 0
        %1326 = vmatpush1.bf16.msra.mxu0 0
        %1327 = vmatprep.subr.bf16.mxu0 0
        %1328 = vmatpush1.bf16.msra.mxu0 0
        %1329 = vmatprep.subr.bf16.mxu0 0
        %1330 = vmatpush1.bf16.msra.mxu0 0
        %1331 = vmatprep.subr.bf16.mxu0 0
        %1332 = vmatpush1.bf16.msra.mxu0 0
        %1333 = vmatprep.subr.bf16.mxu0 0
        %1334 = vmatpush1.bf16.msra.mxu0 0
        %1335 = vmatprep.subr.bf16.mxu0 0
        %1336 = vmatpush1.bf16.msra.mxu0 0
        %1337 = vmatprep.subr.bf16.mxu0 0
        %1338 = vmatpush1.bf16.msra.mxu0 0
        %1339 = vmatprep.subr.bf16.mxu0 0
        %1340 = vmatpush1.bf16.msra.mxu0 0
        %1341 = vmatprep.subr.bf16.mxu0 0
        %1342 = vmatpush1.bf16.msra.mxu0 0
        %1343 = vmatprep.mubr.bf16.mxu0 0
        %1344 = vmatmul.mubr.bf16.gmra.mrb[0].mxu0 %v1309
        %v1345 = vpop.f32.mrb[0].mxu0
        %v1346 = vadd.f32 %v1281, %v1345
        %v1347 = vpop.f32.mrb[0].mxu0
        %v1348 = vpop.f32.mrb[0].mxu0
        %v1349 = vpop.f32.mrb[0].mxu0
        %1350 = vdwg.mxu0
        %v1351 = vadd.f32 %v1346, %v1346
        %v1352 = vsel %vm477, %v1351, 0.0
        %1353 = vadd.xlane.f32.xlu0 %v1352
        %v1354 = vpop.xlane.xlu0 %1353
        %v1355 = vmul.f32 %v1354, %v1172
        %v1356 = vsub.f32 %v1351, %v1355
        %v1357 = vmul.f32 %v1356, %v1356
        %v1358 = vsel %vm477, %v1357, 0.0
        %1359 = vadd.xlane.f32.xlu0 %v1358
        %v1360 = vpop.xlane.xlu0 %1359
        %v1361 = vmul.f32 %v1360, %v1172
        %v1362 = vadd.f32 %v1361, 1e-05
        %v1363 = vrsqrt.pop %v1362
        %v1364 = vmul.f32 %v1356, %v1363
        %v1365 = vld [vmem:[%s11] sm:$0x1]
        %v1367 = vlaneseq
        %v1368 = vshrl.u32 %v1367, 7
        %v1369 = vsub.s32 0, %v1368
        %v1370 = vrot.slane %v1365, %v1369
        %v1372 = vmul.f32 %v1364, %v1370
        %v1373 = vld [vmem:[%s12] sm:$0x1]
        %v1375 = vlaneseq
        %v1376 = vshrl.u32 %v1375, 7
        %v1377 = vsub.s32 0, %v1376
        %v1378 = vrot.slane %v1373, %v1377
        %v1380 = vadd.f32 %v1372, %v1378
        %1381 = vst.msk [vmem:[%s446] sm:$0xff] %vm477, %v1380
        %s1382 = sand.u32 %s314, 1
        %s1383 = scalar_lea.sflag [#allocation4], %s1382
        %s1384 = sand.u32 %s314, 1
        %s1385 = smul.addr %s1384, 8
        %s1386 = scalar_lea.vmem [#allocation5], %s1385
        // Predicated region
        $region77: #{tpu_custom_call.1} parent=71 // pred_check
          %p1387 = pneg %p324
        $region78: #{tpu_custom_call.1} parent=71 // pred_check_branch
          %1389 = sbr.rel (%p1387) target = $region80
        $region79: #{tpu_custom_call.1} parent=71 // pred_region
          %s1391 = ssub.s32 128, 128
          %1392 = vsyncadd %s1383, %s1391
          %s1393 = smul.addr %s28, 128
          %s1394 = scalar_lea.hbm %s13, %s1393
          %s1396 = sshll.u32 %s1386, 4
          %s1397 = int_to_ptr.vmem [resolvable:$true] %s1396
          %1399 = dma.vmem_to_hbm [thread:$0]  %s1397, 128, %s1394, %s1383
        $region80: #{tpu_custom_call.1} parent=71 // pred_fallthru
          _
      $region72: #{tpu_custom_call.1} parent=5 // pred_fallthru
        _
      %p1400 = scmp.le.s32.totalorder 2, %s23
      // Predicated region
      $region81: #{tpu_custom_call.1} parent=5 // pred_check
        %p1401 = pneg %p1400
      $region82: #{tpu_custom_call.1} parent=5 // pred_check_branch
        %1403 = sbr.rel (%p1401) target = $region84
      $region83: #{tpu_custom_call.1} parent=5 // pred_region
        %s1404 = ssub.s32 %s23, 2
        // Predicated region
        $region85: #{tpu_custom_call.1} parent=83 // pred_check
          %p1405 = pneg %p330
        $region86: #{tpu_custom_call.1} parent=83 // pred_check_branch
          %1407 = sbr.rel (%p1405) target = $region88
        $region87: #{tpu_custom_call.1} parent=83 // pred_region
          %s1408 = sand.u32 %s315, 1
          %s1409 = scalar_lea.sflag [#allocation4], %s1408
          %s1410 = sand.u32 %s315, 1
          %s1411 = smul.addr %s1410, 8
          %s1412 = scalar_lea.vmem [#allocation5], %s1411
          %1413 = dma.done %s1409, 128
        $region88: #{tpu_custom_call.1} parent=83 // pred_fallthru
          _
      $region84: #{tpu_custom_call.1} parent=5 // pred_fallthru
        _
    $region6: #{tpu_custom_call.1} parent=1 // loop_footer
      %s27 = sadd.s32 1, %s23
    $region7: #{tpu_custom_call.1} parent=1 // loop_footer_branch
      %22 = sbr.rel target = $region3
    $region8: #{tpu_custom_call.1} parent=1 // loop_exit
      _
    %1414 = vsyncpa [#allocation3], 1
    %s1415 = scalar_lea.sflag [#allocation3], 1
    %1416 = vsyncpa %s1415, 1
    %1417 = vsyncpa [#allocation4], 1
    %s1418 = scalar_lea.sflag [#allocation4], 1
    %1419 = vsyncpa %s1418, 1

</llo_original>
